<compile_context>
chip_gen: v7x
topology: tpu7x:2x2x1
jax: 0.10.0
libtpu: 0.0.40
codegen_flags: <defaults>
</compile_context>

<pallas_src>
import functools
import math

import jax
import jax.numpy as jnp
from jax.experimental import pallas as pl
from jax.experimental.pallas import tpu as pltpu


def _round_up(x: int, m: int) -> int:
    return ((x + m - 1) // m) * m


def _neuralhd_kernel(x_ref, wenc_t_ref, bias_ref, sinb_ref, wcls_t_ref, wnorm_ref,
                     out_ref, sumsq_ref, *, block_d: int):
    """Fused Sinusoid-encode + Centroid cosine-similarity.

    Grid: (B_tiles, D_tiles). D (axis 1) is the reduction axis; the output block and
    the sumsq scratch stay resident across it. Weights are full-size VMEM-resident
    refs sliced per D-chunk inside the kernel.
    """
    k = pl.program_id(1)

    @pl.when(k == 0)
    def _init():
        out_ref[...] = jnp.zeros_like(out_ref)
        sumsq_ref[...] = jnp.zeros_like(sumsq_ref)

    d0 = pl.multiple_of(k * block_d, block_d)

    # --- encoder: proj = x @ W_enc^T (current D-slice), f32 on the MXU ---
    proj = jnp.dot(x_ref[...],
                   wenc_t_ref[:, pl.ds(d0, block_d)],
                   preferred_element_type=jnp.float32)                # (TB, TD) f32

    # --- nonlinearity: cos(p + b) * sin(p) == 0.5 * (sin(2p + b) - sin(b)) ---
    bias = bias_ref[:, pl.ds(d0, block_d)]                            # (1, TD) f32
    sinb = sinb_ref[:, pl.ds(d0, block_d)]                            # (1, TD) f32, host-precomputed
    enc = 0.5 * (jnp.sin(2.0 * proj + bias) - sinb)                   # (TB, TD) f32

    # --- accumulate ||enc||^2 and enc @ W_cls^T (bf16 operands, f32 accumulate) ---
    sumsq_ref[...] += jnp.sum(enc * enc, axis=-1, keepdims=True)      # (TB, 1)
    out_ref[...] += jnp.dot(enc.astype(wcls_t_ref.dtype),
                            wcls_t_ref[pl.ds(d0, block_d), :],
                            preferred_element_type=jnp.float32)       # (TB, Cp)

    # --- finalize: cosine similarity with torchhd-style clamp ---
    @pl.when(k == pl.num_programs(1) - 1)
    def _finalize():
        enc_norm = jnp.sqrt(sumsq_ref[...])                           # (TB, 1)
        denom = jnp.maximum(enc_norm * wnorm_ref[...], 1e-8)          # (TB, Cp)
        out_ref[...] = out_ref[...] / denom


def prepare_neuralhd_weights(w_enc, bias, w_cls, *, block_d: int = 2048,
                             cls_dtype=jnp.bfloat16):
    """One-time weight preprocessing (transpose, pad, cast, norms, sin(bias)).

    block_d ~2048 fits v7x's 64 MiB VMEM comfortably; 4096 is fine on v5e/v6e (128 MiB).
    cls_dtype=bf16 halves W_cls DMA and uses native MXU throughput; accumulation stays f32.
    """
    D, F = w_enc.shape
    C, D2 = w_cls.shape
    assert D == D2 and bias.shape == (1, D)
    f32 = jnp.float32

    TD = min(block_d, _round_up(D, 128))
    Dp = _round_up(D, TD)
    Cp = _round_up(C, 128)   # lane-dense output / MXU N-dim

    # Zero padding is exactly neutral: padded columns give proj=0, bias=0, sin(bias)=0
    # -> enc=0 -> contributes 0 to both the score dot and ||enc||^2.
    wenc_t = jnp.zeros((F, Dp), f32).at[:, :D].set(w_enc.T.astype(f32))
    bias_p = jnp.zeros((1, Dp), f32).at[:, :D].set(bias.astype(f32))
    sinb_p = jnp.sin(bias_p)
    wcls_t = jnp.zeros((Dp, Cp), cls_dtype).at[:D, :C].set(w_cls.T.astype(cls_dtype))
    wnorm = jnp.zeros((1, Cp), f32).at[0, :C].set(
        jnp.sqrt(jnp.sum(w_cls.astype(f32) ** 2, axis=1)))

    meta = dict(F=F, D=D, C=C, Dp=Dp, Cp=Cp, TD=TD,
                cls_bytes=jnp.dtype(cls_dtype).itemsize)
    return (wenc_t, bias_p, sinb_p, wcls_t, wnorm), meta


def neuralhd_forward(x, prepared, meta, *, block_b: int = 256, vmem_limit_bytes=None):
    """NeuralHD forward pass: (B, F) samples -> (B, C) cosine-similarity scores."""
    wenc_t, bias_p, sinb_p, wcls_t, wnorm = prepared
    B, F = x.shape
    assert F == meta["F"]
    Dp, Cp, TD, C = meta["Dp"], meta["Cp"], meta["TD"], meta["C"]
    out_dtype = x.dtype
    f32 = jnp.float32

    # --- batch tiling (sublane multiple of 8); keep >=2 tiles so the "parallel"
    #     axis can shard across the two TensorCores on v7x ---
    TB = min(block_b, _round_up(B, 8))
    if B > 8 and _round_up(B, TB) // TB < 2:
        TB = _round_up(-(-B // 2), 8)
    Bp = _round_up(B, TB)

    xp = jnp.zeros((Bp, F), f32).at[:B].set(x.astype(f32))

    grid = (Bp // TB, Dp // TD)

    # --- raise scoped VMEM only when the resident weights + tiles need it ---
    if vmem_limit_bytes is None:
        est = (2 * TB * F * 4            # x tile (double-buffered)
               + 2 * F * Dp * 4          # resident W_enc^T
               + 4 * Dp * 4              # bias + sin(bias)
               + 2 * Dp * Cp * meta["cls_bytes"]   # resident W_cls^T
               + 2 * Cp * 4              # class norms
               + 2 * TB * Cp * 4         # output block
               + TB * 4                  # sumsq scratch
               + 6 * TB * TD * 4)        # proj/enc temporaries headroom
        if est > 24 * 1024 * 1024:
            vmem_limit_bytes = min(int(est * 1.25), 64 * 1024 * 1024)

    kernel = functools.partial(_neuralhd_kernel, block_d=TD)

    out = pl.pallas_call(
        kernel,
        out_shape=jax.ShapeDtypeStruct((Bp, Cp), f32),
        grid_spec=pltpu.PrefetchScalarGridSpec(
            num_scalar_prefetch=0,
            grid=grid,
            in_specs=[
                pl.BlockSpec((TB, F), lambda i, k: (i, 0)),    # x batch tile
                pl.BlockSpec((F, Dp), lambda i, k: (0, 0)),    # W_enc^T   (VMEM-resident)
                pl.BlockSpec((1, Dp), lambda i, k: (0, 0)),    # bias      (resident)
                pl.BlockSpec((1, Dp), lambda i, k: (0, 0)),    # sin(bias) (resident)
                pl.BlockSpec((Dp, Cp), lambda i, k: (0, 0)),   # W_cls^T   (resident)
                pl.BlockSpec((1, Cp), lambda i, k: (0, 0)),    # class norms (resident)
            ],
            out_specs=pl.BlockSpec((TB, Cp), lambda i, k: (i, 0)),
            scratch_shapes=[
                pltpu.VMEM((TB, 1), f32),    # ||enc||^2 accumulator
            ],
        ),
        compiler_params=pltpu.CompilerParams(
            dimension_semantics=("parallel", "arbitrary"),
            vmem_limit_bytes=vmem_limit_bytes,
        ),
    )(xp, wenc_t, bias_p, sinb_p, wcls_t, wnorm)

    return out[:B, :C].astype(out_dtype)


def neuralhd_reference(x, w_enc, bias, w_cls):
    """Pure-JAX reference of NeuralHD.forward (torchhd Sinusoid + Centroid cosine)."""
    proj = x @ w_enc.T
    enc = jnp.cos(proj + bias) * jnp.sin(proj)
    dot = enc @ w_cls.T
    enc_norm = jnp.sqrt(jnp.sum(enc * enc, axis=-1, keepdims=True))
    cls_norm = jnp.sqrt(jnp.sum(w_cls * w_cls, axis=-1))[None, :]
    return dot / jnp.maximum(enc_norm * cls_norm, 1e-8)


if __name__ == "__main__":
    # Small shapes consistent with the module: B samples of F features, D hidden
    # hyperdimensions, C classes.
    B, F, D, C = 16, 32, 1024, 10

    key = jax.random.PRNGKey(0)
    k1, k2, k3, k4 = jax.random.split(key, 4)
    x = jax.random.normal(k1, (B, F), jnp.float32)
    w_enc = jax.random.normal(k2, (D, F), jnp.float32)            # Sinusoid.weight ~ N(0,1)
    bias = jax.random.uniform(k3, (1, D), jnp.float32, 0.0, 2.0 * math.pi)
    w_cls = jax.random.normal(k4, (C, D), jnp.float32) * 0.1      # Centroid.weight

    prepared, meta = prepare_neuralhd_weights(w_enc, bias, w_cls)
    out = neuralhd_forward(x, prepared, meta)
    out = jax.block_until_ready(out)

    ref = neuralhd_reference(x, w_enc, bias, w_cls)
    assert out.shape == (B, C)
    max_err = float(jnp.max(jnp.abs(out - ref)))
    assert jnp.allclose(out, ref, atol=2e-3, rtol=2e-3), max_err

    print("KERNEL_OK")
</pallas_src>

<mosaic_0001>
module attributes {stable_mosaic.version = 11 : i64} {
  func.func @_neuralhd_kernel(%arg0: i32, %arg1: i32, %arg2: memref<8x32xf32, #tpu.memory_space<vmem>>, %arg3: memref<32x1024xf32, #tpu.memory_space<vmem>>, %arg4: memref<1x1024xf32, #tpu.memory_space<vmem>>, %arg5: memref<1x1024xf32, #tpu.memory_space<vmem>>, %arg6: memref<1024x128xbf16, #tpu.memory_space<vmem>>, %arg7: memref<1x128xf32, #tpu.memory_space<vmem>>, %arg8: memref<8x128xf32, #tpu.memory_space<vmem>>, %arg9: memref<8x1xf32, #tpu.memory_space<vmem>>) attributes {dimension_semantics = [#tpu.dimension_semantics<parallel>, #tpu.dimension_semantics<arbitrary>], iteration_bounds = array<i64: 2, 1>, scalar_prefetch = 0 : i64, scratch_operands = 1 : i64, tpu.core_type = #tpu.core_type<tc>, window_params = [{transform_indices = @transform_0, window_bounds = array<i64: 8, 32>}, {pipeline_mode = #tpu.pipeline_mode<synchronous>, transform_indices = @transform_1, window_bounds = array<i64: 32, 1024>}, {pipeline_mode = #tpu.pipeline_mode<synchronous>, transform_indices = @transform_2, window_bounds = array<i64: 1, 1024>}, {pipeline_mode = #tpu.pipeline_mode<synchronous>, transform_indices = @transform_3, window_bounds = array<i64: 1, 1024>}, {pipeline_mode = #tpu.pipeline_mode<synchronous>, transform_indices = @transform_4, window_bounds = array<i64: 1024, 128>}, {pipeline_mode = #tpu.pipeline_mode<synchronous>, transform_indices = @transform_5, window_bounds = array<i64: 1, 128>}, {transform_indices = @transform_6, window_bounds = array<i64: 8, 128>}]} {
    %c0_i32 = arith.constant 0 : i32
    %0 = arith.cmpi eq, %arg1, %c0_i32 : i32
    %1 = arith.extui %0 : i1 to i32
    %c0_i32_0 = arith.constant 0 : i32
    %2 = arith.cmpi ne, %1, %c0_i32_0 : i32
    scf.if %2 {
      %cst_20 = arith.constant 0.000000e+00 : f32
      %38 = vector.broadcast %cst_20 : f32 to vector<8x128xf32>
      %c0_21 = arith.constant 0 : index
      %c0_22 = arith.constant 0 : index
      %39 = vector.load %arg8[%c0_21, %c0_22] : memref<8x128xf32, #tpu.memory_space<vmem>>, vector<8x128xf32>
      tpu.vector_store %arg8[%c0_21, %c0_22], %38 {strides = array<i32>} : memref<8x128xf32, #tpu.memory_space<vmem>>, vector<8x128xf32>,
      %cst_23 = arith.constant 0.000000e+00 : f32
      %40 = vector.broadcast %cst_23 : f32 to vector<8x1xf32>
      %c0_24 = arith.constant 0 : index
      %c0_25 = arith.constant 0 : index
      %41 = vector.load %arg9[%c0_24, %c0_25] : memref<8x1xf32, #tpu.memory_space<vmem>>, vector<8x1xf32>
      tpu.vector_store %arg9[%c0_24, %c0_25], %40 {strides = array<i32>} : memref<8x1xf32, #tpu.memory_space<vmem>>, vector<8x1xf32>,
    } else {
    }
    %c1024_i32 = arith.constant 1024 : i32
    %3 = arith.muli %arg1, %c1024_i32 : i32
    %4 = tpu.assume_multiple %3, 1024 : i32
    %c0 = arith.constant 0 : index
    %c0_1 = arith.constant 0 : index
    %5 = vector.load %arg2[%c0, %c0_1] : memref<8x32xf32, #tpu.memory_space<vmem>>, vector<8x32xf32>
    %c0_2 = arith.constant 0 : index
    %6 = arith.index_cast %4 : i32 to index
    %7 = vector.load %arg3[%c0_2, %6] : memref<32x1024xf32, #tpu.memory_space<vmem>>, vector<32x1024xf32>
    %cst = arith.constant dense<0.000000e+00> : vector<8x1024xf32>
    %8 = tpu.matmul %5, %7, %cst {dimension_numbers = #tpu.dot_dimension_numbers<[1], [0], [0], [1], [0, 0, 1, 1], [], []>} : vector<8x32xf32>, vector<32x1024xf32>, vector<8x1024xf32> -> vector<8x1024xf32>
    %c0_3 = arith.constant 0 : index
    %9 = arith.index_cast %4 : i32 to index
    %10 = vector.load %arg4[%c0_3, %9] : memref<1x1024xf32, #tpu.memory_space<vmem>>, vector<1x1024xf32>
    %c0_4 = arith.constant 0 : index
    %11 = arith.index_cast %4 : i32 to index
    %12 = vector.load %arg5[%c0_4, %11] : memref<1x1024xf32, #tpu.memory_space<vmem>>, vector<1x1024xf32>
    %cst_5 = arith.constant 2.000000e+00 : f32
    %13 = vector.broadcast %cst_5 : f32 to vector<8x1024xf32>
    %14 = arith.mulf %13, %8 : vector<8x1024xf32>
    %15 = vector.broadcast %10 : vector<1x1024xf32> to vector<8x1024xf32>
    %16 = arith.addf %14, %15 : vector<8x1024xf32>
    %17 = math.sin %16 : vector<8x1024xf32>
    %18 = vector.broadcast %12 : vector<1x1024xf32> to vector<8x1024xf32>
    %19 = arith.subf %17, %18 : vector<8x1024xf32>
    %cst_6 = arith.constant 5.000000e-01 : f32
    %20 = vector.broadcast %cst_6 : f32 to vector<8x1024xf32>
    %21 = arith.mulf %20, %19 : vector<8x1024xf32>
    %c0_7 = arith.constant 0 : index
    %c0_8 = arith.constant 0 : index
    %22 = vector.load %arg9[%c0_7, %c0_8] : memref<8x1xf32, #tpu.memory_space<vmem>>, vector<8x1xf32>
    %23 = arith.mulf %21, %21 : vector<8x1024xf32>
    %cst_9 = arith.constant dense<0.000000e+00> : vector<8xf32>
    %24 = vector.multi_reduction <add>, %23, %cst_9 [1] : vector<8x1024xf32> to vector<8xf32>
    %25 = vector.shape_cast %24 : vector<8xf32> to vector<8x1xf32>
    %26 = arith.addf %22, %25 : vector<8x1xf32>
    %c0_10 = arith.constant 0 : index
    %c0_11 = arith.constant 0 : index
    %27 = vector.load %arg9[%c0_10, %c0_11] : memref<8x1xf32, #tpu.memory_space<vmem>>, vector<8x1xf32>
    tpu.vector_store %arg9[%c0_10, %c0_11], %26 {strides = array<i32>} : memref<8x1xf32, #tpu.memory_space<vmem>>, vector<8x1xf32>,
    %c0_12 = arith.constant 0 : index
    %c0_13 = arith.constant 0 : index
    %28 = vector.load %arg8[%c0_12, %c0_13] : memref<8x128xf32, #tpu.memory_space<vmem>>, vector<8x128xf32>
    %29 = arith.truncf %21 : vector<8x1024xf32> to vector<8x1024xbf16>
    %30 = arith.index_cast %4 : i32 to index
    %c0_14 = arith.constant 0 : index
    %31 = vector.load %arg6[%30, %c0_14] : memref<1024x128xbf16, #tpu.memory_space<vmem>>, vector<1024x128xbf16>
    %cst_15 = arith.constant dense<0.000000e+00> : vector<8x128xf32>
    %32 = tpu.matmul %29, %31, %cst_15 {dimension_numbers = #tpu.dot_dimension_numbers<[1], [0], [0], [1], [0, 0, 1, 1], [], []>} : vector<8x1024xbf16>, vector<1024x128xbf16>, vector<8x128xf32> -> vector<8x128xf32>
    %33 = arith.addf %28, %32 : vector<8x128xf32>
    %c0_16 = arith.constant 0 : index
    %c0_17 = arith.constant 0 : index
    %34 = vector.load %arg8[%c0_16, %c0_17] : memref<8x128xf32, #tpu.memory_space<vmem>>, vector<8x128xf32>
    tpu.vector_store %arg8[%c0_16, %c0_17], %33 {strides = array<i32>} : memref<8x128xf32, #tpu.memory_space<vmem>>, vector<8x128xf32>,
    %c0_i32_18 = arith.constant 0 : i32
    %35 = arith.cmpi eq, %arg1, %c0_i32_18 : i32
    %36 = arith.extui %35 : i1 to i32
    %c0_i32_19 = arith.constant 0 : i32
    %37 = arith.cmpi ne, %36, %c0_i32_19 : i32
    scf.if %37 {
      %c0_20 = arith.constant 0 : index
      %c0_21 = arith.constant 0 : index
      %38 = vector.load %arg9[%c0_20, %c0_21] : memref<8x1xf32, #tpu.memory_space<vmem>>, vector<8x1xf32>
      %39 = math.sqrt %38 : vector<8x1xf32>
      %c0_22 = arith.constant 0 : index
      %c0_23 = arith.constant 0 : index
      %40 = vector.load %arg7[%c0_22, %c0_23] : memref<1x128xf32, #tpu.memory_space<vmem>>, vector<1x128xf32>
      %41 = vector.broadcast %39 : vector<8x1xf32> to vector<8x128xf32>
      %42 = vector.broadcast %40 : vector<1x128xf32> to vector<8x128xf32>
      %43 = arith.mulf %41, %42 : vector<8x128xf32>
      %cst_24 = arith.constant 9.99999993E-9 : f32
      %44 = vector.broadcast %cst_24 : f32 to vector<8x128xf32>
      %45 = arith.maximumf %43, %44 : vector<8x128xf32>
      %c0_25 = arith.constant 0 : index
      %c0_26 = arith.constant 0 : index
      %46 = vector.load %arg8[%c0_25, %c0_26] : memref<8x128xf32, #tpu.memory_space<vmem>>, vector<8x128xf32>
      %47 = arith.divf %46, %45 : vector<8x128xf32>
      %c0_27 = arith.constant 0 : index
      %c0_28 = arith.constant 0 : index
      %48 = vector.load %arg8[%c0_27, %c0_28] : memref<8x128xf32, #tpu.memory_space<vmem>>, vector<8x128xf32>
      tpu.vector_store %arg8[%c0_27, %c0_28], %47 {strides = array<i32>} : memref<8x128xf32, #tpu.memory_space<vmem>>, vector<8x128xf32>,
    } else {
    }
    return
  }
  func.func @transform_0(%arg0: i32, %arg1: i32) -> (i32, i32) {
    %c0_i32 = arith.constant 0 : i32
    %c0_i32_0 = arith.constant 0 : i32
    return %arg0, %c0_i32 : i32, i32
  }
  func.func @transform_1(%arg0: i32, %arg1: i32) -> (i32, i32) {
    %c0_i32 = arith.constant 0 : i32
    %c0_i32_0 = arith.constant 0 : i32
    %c0_i32_1 = arith.constant 0 : i32
    return %c0_i32, %c0_i32_0 : i32, i32
  }
  func.func @transform_2(%arg0: i32, %arg1: i32) -> (i32, i32) {
    %c0_i32 = arith.constant 0 : i32
    %c0_i32_0 = arith.constant 0 : i32
    %c0_i32_1 = arith.constant 0 : i32
    return %c0_i32, %c0_i32_0 : i32, i32
  }
  func.func @transform_3(%arg0: i32, %arg1: i32) -> (i32, i32) {
    %c0_i32 = arith.constant 0 : i32
    %c0_i32_0 = arith.constant 0 : i32
    %c0_i32_1 = arith.constant 0 : i32
    return %c0_i32, %c0_i32_0 : i32, i32
  }
  func.func @transform_4(%arg0: i32, %arg1: i32) -> (i32, i32) {
    %c0_i32 = arith.constant 0 : i32
    %c0_i32_0 = arith.constant 0 : i32
    %c0_i32_1 = arith.constant 0 : i32
    return %c0_i32, %c0_i32_0 : i32, i32
  }
  func.func @transform_5(%arg0: i32, %arg1: i32) -> (i32, i32) {
    %c0_i32 = arith.constant 0 : i32
    %c0_i32_0 = arith.constant 0 : i32
    %c0_i32_1 = arith.constant 0 : i32
    return %c0_i32, %c0_i32_0 : i32, i32
  }
  func.func @transform_6(%arg0: i32, %arg1: i32) -> (i32, i32) {
    %c0_i32 = arith.constant 0 : i32
    %c0_i32_0 = arith.constant 0 : i32
    return %arg0, %c0_i32 : i32, i32
  }
}

</mosaic_0001>

<llo_original>
// kernel: tpu_custom_call.1
$region0: #{tpu_custom_call.1}
  #allocation0 [shape = 'u32[]', space=smem, size = 0x4, offset = 0x4, fixed_abs, tag = 'smem constant byte address 0x4 - core index']
  #allocation1 [shape = 'u32[144,128]{1,0:T(1,128)}', space=vmem, size = 0x12000, scoped, tag = 'internal scratch']
  #allocation2 [shape = 'f32[8,1]{1,0:T(8,128)}', space=vmem, size = 0x1000, scoped, tag = 'scratch operand']
  %s0 = inlined_call_operand.hbm [shape: f32[16,32], index: 0, kind: input, shape index: {}]
  %s1 = inlined_call_operand.hbm [shape: f32[32,1024], index: 1, kind: input, shape index: {}]
  %s2 = inlined_call_operand.hbm [shape: f32[1,1024], index: 2, kind: input, shape index: {}]
  %s3 = inlined_call_operand.vmem [shape: f32[1,1024], index: 3, kind: input, shape index: {}]
  %s4 = inlined_call_operand.hbm [shape: bf16[1024,128], index: 4, kind: input, shape index: {}]
  %s5 = inlined_call_operand.vmem [shape: f32[1,128], index: 5, kind: input, shape index: {}]
  %s6 = inlined_call_operand.hbm [shape: f32[16,128], index: 6, kind: output, shape index: {}]
  %s7 = sld [smem:[#allocation0]]
  $region81: #{tpu_custom_call.1} parent=0
    _
  %s9 = ssub.s32 1, %s7
  %s10 = scalar_select 0, %s9, %s7
  $region1: #{tpu_custom_call.1} parent=0
    #allocation3 [shape = 'u8[8192]{0}', space=vmem, size = 0x2000, scoped, tag = 'input window, operand 0']
    #allocation4 [shape = 's32[2]{0}', space=sflag, size = 0x8, scoped, tag = 'scoped memory for tpu_custom_call.1']
    #allocation5 [shape = 's32[2]{0}', space=sflag, size = 0x8, scoped, tag = 'scoped memory for tpu_custom_call.1']
    #allocation6 [shape = 'u8[131072]{0}', space=vmem, size = 0x20000, scoped, tag = 'input window, operand 1, single buffered']
    #allocation7 [shape = 's32[1]{0}', space=sflag, size = 0x4, scoped, tag = 'scoped memory for tpu_custom_call.1']
    #allocation8 [shape = 'u8[4096]{0}', space=vmem, size = 0x1000, scoped, tag = 'input window, operand 2, single buffered']
    #allocation9 [shape = 'u8[262144]{0}', space=vmem, size = 0x40000, scoped, tag = 'input window, operand 4, single buffered']
    #allocation10 [shape = 's32[1]{0}', space=sflag, size = 0x4, scoped, tag = 'scoped memory for tpu_custom_call.1']
    #allocation11 [shape = 'u8[8192]{0}', space=vmem, size = 0x2000, scoped, tag = 'output window, operand 0']
    %11 = vsyncpa [#allocation4], 0
    %s12 = scalar_lea.sflag [#allocation4], 1
    %13 = vsyncpa %s12, 0
    %14 = vsyncpa [#allocation7], 0
    %15 = vsyncpa [#allocation10], 0
    %16 = vsyncpa [#allocation5], 0
    %s17 = scalar_lea.sflag [#allocation5], 1
    %18 = vsyncpa %s17, 0
    loop: start=0, step=1, limit=4
    $region2: #{tpu_custom_call.1} parent=1 // loop_pre_header
      _
    $region3: #{tpu_custom_call.1} parent=1 // loop_header
      %s20 = sphi 0, %s24
      %p21 = scmp.ge.s32.totalorder %s20, 4
      %s27 = sphi 0, %s39
      %s28 = sphi 0, %s35
      %s29 = sphi 0, %s27
      %s30 = sphi 0, %s28
      %s31 = sphi 0, %s29
      %s32 = sphi 0, %s30
      %s42 = sphi 0, %s44
      %s45 = sphi 0, %s42
      %s46 = sphi 0, %s45
      %s62 = sphi 0, %s46
      %s66 = sphi 0, %s66
      %s68 = sphi 0, %s66
      %s69 = sphi 0, %s68
      %s83 = sphi 0, %s69
      %s87 = sphi 0, %s87
      %s89 = sphi 0, %s87
      %s90 = sphi 0, %s89
      %s104 = sphi 0, %s90
      %s108 = sphi 0, %s108
      %s110 = sphi 0, %s108
      %s111 = sphi 0, %s110
      %s125 = sphi 0, %s111
      %s129 = sphi 0, %s129
      %s131 = sphi 0, %s129
      %s132 = sphi 0, %s131
      %s146 = sphi 0, %s132
      %s150 = sphi 0, %s150
      %s152 = sphi 0, %s150
      %s153 = sphi 0, %s152
      %s167 = sphi 0, %s153
      %s173 = sphi 0, %s175
      %s176 = sphi 0, %s173
      %s177 = sphi 0, %s176
      %s193 = sphi 0, %s177
    $region4: #{tpu_custom_call.1} parent=1 // loop_header_branch
      %23 = sbr.rel (%p21) target = $region8
    $region5: #{tpu_custom_call.1} parent=1 // loop_body
      %s25 = ssub.s32 %s20, 1
      %s26 = ssub.s32 %s20, 2
      %s33 = sadd.s32 1, %s28
      %p34 = scmp.ge.s32.totalorder %s33, 1
      %s35 = scalar_select %p34, 0, %s33
      %s36 = sadd.s32 1, %s27
      %s37 = scalar_select %p34, %s36, %s27
      %p38 = scmp.ge.s32.totalorder %s37, 2
      %s39 = scalar_select %p38, 0, %s37
      %s40 = ssub.s32 %s27, %s39
      %p41 = scmp.eq.s32.totalorder %s40, 0
      %s43 = sadd.s32 %s42, 1
      %s44 = scalar_select %p41, %s42, %s43
      %p47 = pneg %p41
      %p48 = scmp.eq.s32.totalorder %s20, 1
      %p49 = por %p47, %p48
      %p50 = scmp.ne.s32.totalorder %s42, %s45
      %p51 = scmp.eq.s32.totalorder %s20, 0
      %p52 = por %p50, %p51
      %p53 = scmp.ne.s32.totalorder %s42, %s45
      %p54 = scmp.eq.s32.totalorder %s25, 1
      %p55 = por %p53, %p54
      %p56 = scmp.ne.s32.totalorder %s45, %s46
      %p57 = scmp.eq.s32.totalorder %s25, 0
      %p58 = por %p56, %p57
      %p59 = scmp.ne.s32.totalorder %s45, %s46
      %p60 = scmp.eq.s32.totalorder %s26, 1
      %p61 = por %p59, %p60
      %p63 = scmp.ne.s32.totalorder %s46, %s62
      %p64 = scmp.eq.s32.totalorder %s26, 0
      %p65 = por %p63, %p64
      %s67 = sadd.s32 %s66, 1
      %p70 = scmp.eq.s32.totalorder %s20, 1
      %p71 = scmp.ne.s32.totalorder %s66, %s68
      %p72 = scmp.eq.s32.totalorder %s20, 0
      %p73 = por %p71, %p72
      %p74 = scmp.ne.s32.totalorder %s66, %s68
      %p75 = scmp.eq.s32.totalorder %s25, 1
      %p76 = por %p74, %p75
      %p77 = scmp.ne.s32.totalorder %s68, %s69
      %p78 = scmp.eq.s32.totalorder %s25, 0
      %p79 = por %p77, %p78
      %p80 = scmp.ne.s32.totalorder %s68, %s69
      %p81 = scmp.eq.s32.totalorder %s26, 1
      %p82 = por %p80, %p81
      %p84 = scmp.ne.s32.totalorder %s69, %s83
      %p85 = scmp.eq.s32.totalorder %s26, 0
      %p86 = por %p84, %p85
      %s88 = sadd.s32 %s87, 1
      %p91 = scmp.eq.s32.totalorder %s20, 1
      %p92 = scmp.ne.s32.totalorder %s87, %s89
      %p93 = scmp.eq.s32.totalorder %s20, 0
      %p94 = por %p92, %p93
      %p95 = scmp.ne.s32.totalorder %s87, %s89
      %p96 = scmp.eq.s32.totalorder %s25, 1
      %p97 = por %p95, %p96
      %p98 = scmp.ne.s32.totalorder %s89, %s90
      %p99 = scmp.eq.s32.totalorder %s25, 0
      %p100 = por %p98, %p99
      %p101 = scmp.ne.s32.totalorder %s89, %s90
      %p102 = scmp.eq.s32.totalorder %s26, 1
      %p103 = por %p101, %p102
      %p105 = scmp.ne.s32.totalorder %s90, %s104
      %p106 = scmp.eq.s32.totalorder %s26, 0
      %p107 = por %p105, %p106
      %s109 = sadd.s32 %s108, 1
      %p112 = scmp.eq.s32.totalorder %s20, 1
      %p113 = scmp.ne.s32.totalorder %s108, %s110
      %p114 = scmp.eq.s32.totalorder %s20, 0
      %p115 = por %p113, %p114
      %p116 = scmp.ne.s32.totalorder %s108, %s110
      %p117 = scmp.eq.s32.totalorder %s25, 1
      %p118 = por %p116, %p117
      %p119 = scmp.ne.s32.totalorder %s110, %s111
      %p120 = scmp.eq.s32.totalorder %s25, 0
      %p121 = por %p119, %p120
      %p122 = scmp.ne.s32.totalorder %s110, %s111
      %p123 = scmp.eq.s32.totalorder %s26, 1
      %p124 = por %p122, %p123
      %p126 = scmp.ne.s32.totalorder %s111, %s125
      %p127 = scmp.eq.s32.totalorder %s26, 0
      %p128 = por %p126, %p127
      %s130 = sadd.s32 %s129, 1
      %p133 = scmp.eq.s32.totalorder %s20, 1
      %p134 = scmp.ne.s32.totalorder %s129, %s131
      %p135 = scmp.eq.s32.totalorder %s20, 0
      %p136 = por %p134, %p135
      %p137 = scmp.ne.s32.totalorder %s129, %s131
      %p138 = scmp.eq.s32.totalorder %s25, 1
      %p139 = por %p137, %p138
      %p140 = scmp.ne.s32.totalorder %s131, %s132
      %p141 = scmp.eq.s32.totalorder %s25, 0
      %p142 = por %p140, %p141
      %p143 = scmp.ne.s32.totalorder %s131, %s132
      %p144 = scmp.eq.s32.totalorder %s26, 1
      %p145 = por %p143, %p144
      %p147 = scmp.ne.s32.totalorder %s132, %s146
      %p148 = scmp.eq.s32.totalorder %s26, 0
      %p149 = por %p147, %p148
      %s151 = sadd.s32 %s150, 1
      %p154 = scmp.eq.s32.totalorder %s20, 1
      %p155 = scmp.ne.s32.totalorder %s150, %s152
      %p156 = scmp.eq.s32.totalorder %s20, 0
      %p157 = por %p155, %p156
      %p158 = scmp.ne.s32.totalorder %s150, %s152
      %p159 = scmp.eq.s32.totalorder %s25, 1
      %p160 = por %p158, %p159
      %p161 = scmp.ne.s32.totalorder %s152, %s153
      %p162 = scmp.eq.s32.totalorder %s25, 0
      %p163 = por %p161, %p162
      %p164 = scmp.ne.s32.totalorder %s152, %s153
      %p165 = scmp.eq.s32.totalorder %s26, 1
      %p166 = por %p164, %p165
      %p168 = scmp.ne.s32.totalorder %s153, %s167
      %p169 = scmp.eq.s32.totalorder %s26, 0
      %p170 = por %p168, %p169
      %s171 = ssub.s32 %s27, %s39
      %p172 = scmp.eq.s32.totalorder %s171, 0
      %s174 = sadd.s32 %s173, 1
      %s175 = scalar_select %p172, %s173, %s174
      %p178 = pneg %p172
      %p179 = scmp.eq.s32.totalorder %s20, 1
      %p180 = por %p178, %p179
      %p181 = scmp.ne.s32.totalorder %s173, %s176
      %p182 = scmp.eq.s32.totalorder %s20, 0
      %p183 = por %p181, %p182
      %p184 = scmp.ne.s32.totalorder %s173, %s176
      %p185 = scmp.eq.s32.totalorder %s25, 1
      %p186 = por %p184, %p185
      %p187 = scmp.ne.s32.totalorder %s176, %s177
      %p188 = scmp.eq.s32.totalorder %s25, 0
      %p189 = por %p187, %p188
      %p190 = scmp.ne.s32.totalorder %s176, %s177
      %p191 = scmp.eq.s32.totalorder %s26, 1
      %p192 = por %p190, %p191
      %p194 = scmp.ne.s32.totalorder %s177, %s193
      %p195 = scmp.eq.s32.totalorder %s26, 0
      %p196 = por %p194, %p195
      %p197 = scmp.le.s32.totalorder 1, %s20
      %p198 = scmp.lt.s32.totalorder %s20, 3
      %p199 = pnand %p197, %p198
      %p200 = pneg %p199
      // Predicated region
      $region9: #{tpu_custom_call.1} parent=5 // pred_check
        _
      $region10: #{tpu_custom_call.1} parent=5 // pred_check_branch
        %202 = sbr.rel (%p199) target = $region12
      $region11: #{tpu_custom_call.1} parent=5 // pred_region
        %s203 = ssub.s32 %s20, 1
        // Predicated region
        $region13: #{tpu_custom_call.1} parent=11 // pred_check
          %p204 = pneg %p79
        $region14: #{tpu_custom_call.1} parent=11 // pred_check_branch
          %206 = sbr.rel (%p204) target = $region16
        $region15: #{tpu_custom_call.1} parent=11 // pred_region
          %s208 = ssub.s32 4096, 4096
          %209 = vsyncadd [#allocation7], %s208
          %s210 = sshll.u32 [#allocation6], 4
          %s211 = int_to_ptr.vmem [resolvable:$true] %s210
          %216 = dma.hbm_to_vmem [thread:$0]  %s1, 4096, %s211, [#allocation7], 1024, 1024, 64
        $region16: #{tpu_custom_call.1} parent=11 // pred_fallthru
          _
        // Predicated region
        $region17: #{tpu_custom_call.1} parent=11 // pred_check
          %p217 = pneg %p100
        $region18: #{tpu_custom_call.1} parent=11 // pred_check_branch
          %219 = sbr.rel (%p217) target = $region20
        $region19: #{tpu_custom_call.1} parent=11 // pred_region
          %s221 = ssub.s32 128, 128
          %222 = vsyncadd [#allocation7], %s221
          %s224 = sshll.u32 [#allocation8], 4
          %s225 = int_to_ptr.vmem [resolvable:$true] %s224
          %227 = dma.hbm_to_vmem [thread:$0]  %s2, 128, %s225, [#allocation7]
        $region20: #{tpu_custom_call.1} parent=11 // pred_fallthru
          _
        // Predicated region
        $region21: #{tpu_custom_call.1} parent=11 // pred_check
          %p228 = pneg %p121
        $region22: #{tpu_custom_call.1} parent=11 // pred_check_branch
          %230 = sbr.rel (%p228) target = $region24
        $region23: #{tpu_custom_call.1} parent=11 // pred_region
          _
        $region24: #{tpu_custom_call.1} parent=11 // pred_fallthru
          _
        // Predicated region
        $region25: #{tpu_custom_call.1} parent=11 // pred_check
          %p231 = pneg %p142
        $region26: #{tpu_custom_call.1} parent=11 // pred_check_branch
          %233 = sbr.rel (%p231) target = $region28
        $region27: #{tpu_custom_call.1} parent=11 // pred_region
          %s235 = ssub.s32 8192, 8192
          %236 = vsyncadd [#allocation10], %s235
          %s237 = sshll.u32 [#allocation9], 4
          %s238 = int_to_ptr.vmem [resolvable:$true] %s237
          %243 = dma.hbm_to_vmem [thread:$0]  %s4, 8192, %s238, [#allocation10], 64, 64, 4
        $region28: #{tpu_custom_call.1} parent=11 // pred_fallthru
          _
        // Predicated region
        $region29: #{tpu_custom_call.1} parent=11 // pred_check
          %p244 = pneg %p163
        $region30: #{tpu_custom_call.1} parent=11 // pred_check_branch
          %246 = sbr.rel (%p244) target = $region32
        $region31: #{tpu_custom_call.1} parent=11 // pred_region
          _
        $region32: #{tpu_custom_call.1} parent=11 // pred_fallthru
          _
      $region12: #{tpu_custom_call.1} parent=5 // pred_fallthru
        _
      %p247 = scmp.lt.s32.totalorder %s20, 2
      // Predicated region
      $region33: #{tpu_custom_call.1} parent=5 // pred_check
        %p248 = pneg %p247
      $region34: #{tpu_custom_call.1} parent=5 // pred_check_branch
        %250 = sbr.rel (%p248) target = $region36
      $region35: #{tpu_custom_call.1} parent=5 // pred_region
        // Predicated region
        $region37: #{tpu_custom_call.1} parent=35 // pred_check
          %p251 = pneg %p52
        $region38: #{tpu_custom_call.1} parent=35 // pred_check_branch
          %253 = sbr.rel (%p251) target = $region40
        $region39: #{tpu_custom_call.1} parent=35 // pred_region
          %s254 = sand.u32 %s42, 1
          %s255 = scalar_lea.sflag [#allocation4], %s254
          %s256 = sand.u32 %s42, 1
          %s257 = smul.addr %s256, 8
          %s258 = scalar_lea.vmem [#allocation3], %s257
          %s260 = ssub.s32 128, 128
          %261 = vsyncadd %s255, %s260
          %s262 = smul.addr %s27, 128
          %s263 = scalar_lea.hbm %s0, %s262
          %s265 = sshll.u32 %s258, 4
          %s266 = int_to_ptr.vmem [resolvable:$true] %s265
          %268 = dma.hbm_to_vmem [thread:$0]  %s263, 128, %s266, %s255
        $region40: #{tpu_custom_call.1} parent=35 // pred_fallthru
          _
      $region36: #{tpu_custom_call.1} parent=5 // pred_fallthru
        _
      %p269 = scmp.le.s32.totalorder 1, %s20
      %p270 = scmp.lt.s32.totalorder %s20, 3
      %p271 = pnand %p269, %p270
      %p272 = pneg %p271
      // Predicated region
      $region41: #{tpu_custom_call.1} parent=5 // pred_check
        _
      $region42: #{tpu_custom_call.1} parent=5 // pred_check_branch
        %274 = sbr.rel (%p271) target = $region44
      $region43: #{tpu_custom_call.1} parent=5 // pred_region
        %s275 = ssub.s32 %s20, 1
        %s276 = sand.u32 %s45, 1
        %s277 = scalar_lea.sflag [#allocation4], %s276
        %s278 = sand.u32 %s45, 1
        %s279 = smul.addr %s278, 8
        %s280 = scalar_lea.vmem [#allocation3], %s279
        // Predicated region
        $region45: #{tpu_custom_call.1} parent=43 // pred_check
          %p281 = pneg %p58
        $region46: #{tpu_custom_call.1} parent=43 // pred_check_branch
          %283 = sbr.rel (%p281) target = $region48
        $region47: #{tpu_custom_call.1} parent=43 // pred_region
          %284 = dma.done %s277, 128
        $region48: #{tpu_custom_call.1} parent=43 // pred_fallthru
          _
        // Predicated region
        $region49: #{tpu_custom_call.1} parent=43 // pred_check
          %p285 = pneg %p79
        $region50: #{tpu_custom_call.1} parent=43 // pred_check_branch
          %287 = sbr.rel (%p285) target = $region52
        $region51: #{tpu_custom_call.1} parent=43 // pred_region
          %288 = dma.done [#allocation7], 4096
        $region52: #{tpu_custom_call.1} parent=43 // pred_fallthru
          _
        // Predicated region
        $region53: #{tpu_custom_call.1} parent=43 // pred_check
          %p289 = pneg %p100
        $region54: #{tpu_custom_call.1} parent=43 // pred_check_branch
          %291 = sbr.rel (%p289) target = $region56
        $region55: #{tpu_custom_call.1} parent=43 // pred_region
          %292 = dma.done [#allocation7], 128
        $region56: #{tpu_custom_call.1} parent=43 // pred_fallthru
          _
        // Predicated region
        $region57: #{tpu_custom_call.1} parent=43 // pred_check
          %p293 = pneg %p142
        $region58: #{tpu_custom_call.1} parent=43 // pred_check_branch
          %295 = sbr.rel (%p293) target = $region60
        $region59: #{tpu_custom_call.1} parent=43 // pred_region
          %296 = dma.done [#allocation10], 8192
        $region60: #{tpu_custom_call.1} parent=43 // pred_fallthru
          _
        %s297 = sand.u32 %s45, 1
        %s298 = scalar_lea.sflag [#allocation4], %s297
        %s299 = sand.u32 %s45, 1
        %s300 = smul.addr %s299, 8
        %s301 = scalar_lea.vmem [#allocation3], %s300
        %p302 = pneg %p58
        %p303 = pneg %p55
        %p304 = pneg %p79
        %p305 = pneg %p76
        %p306 = pneg %p100
        %p307 = pneg %p97
        %p308 = pneg %p121
        %p309 = pneg %p118
        %p310 = pneg %p142
        %p311 = pneg %p139
        %p312 = pneg %p163
        %p313 = pneg %p160
        %p314 = pneg %p189
        %p315 = pneg %p186
        %s316 = sand.u32 %s176, 1
        %s317 = scalar_lea.sflag [#allocation5], %s316
        %s318 = sand.u32 %s176, 1
        %s319 = smul.addr %s318, 8
        %s320 = scalar_lea.vmem [#allocation11], %s319
        %p322 = scmp.eq.s32.totalorder %s30, 0
        // Predicated region
        $region61: #{tpu_custom_call.1} parent=43 // pred_check
          %p323 = pneg %p322
        $region62: #{tpu_custom_call.1} parent=43 // pred_check_branch
          %325 = sbr.rel (%p323) target = $region64
        $region63: #{tpu_custom_call.1} parent=43 // pred_region
          %326 = vst [vmem:[%s320] sm:$0xff] 0.0
          %vm327 = vcmask 7168
          %328 = vst.msk [vmem:[#allocation2] sm:$0xff] %vm327, 0.0
        $region64: #{tpu_custom_call.1} parent=43 // pred_fallthru
          _
        %s329 = smul.u32 %s30, 1024
        %v330 = vld [vmem:[%s280] sm:$0xff]
        %s331 = sshra.s32 %s329, 7
        %s332 = sand.u32 %s329, 127
        %s333 = smul.addr %s331, 8
        %s334 = scalar_lea.vmem [#allocation6], %s333
        %v335 = vld [vmem:[%s334] sm:$0xff]
        %v336 = vld [vmem:[%s334 + $0x8] sm:$0xff]
        %v337 = vld [vmem:[%s334 + $0x10] sm:$0xff]
        %v338 = vld [vmem:[%s334 + $0x18] sm:$0xff]
        %v339 = vld [vmem:[%s334 + $0x20] sm:$0xff]
        %v340 = vld [vmem:[%s334 + $0x28] sm:$0xff]
        %v341 = vld [vmem:[%s334 + $0x30] sm:$0xff]
        %v342 = vld [vmem:[%s334 + $0x38] sm:$0xff]
        %v343 = vld [vmem:[%s334 + $0x40] sm:$0xff]
        %v344 = vld [vmem:[%s334 + $0x48] sm:$0xff]
        %v345 = vld [vmem:[%s334 + $0x50] sm:$0xff]
        %v346 = vld [vmem:[%s334 + $0x58] sm:$0xff]
        %v347 = vld [vmem:[%s334 + $0x60] sm:$0xff]
        %v348 = vld [vmem:[%s334 + $0x68] sm:$0xff]
        %v349 = vld [vmem:[%s334 + $0x70] sm:$0xff]
        %v350 = vld [vmem:[%s334 + $0x78] sm:$0xff]
        %v351 = vld [vmem:[%s334 + $0x80] sm:$0xff]
        %v352 = vld [vmem:[%s334 + $0x88] sm:$0xff]
        %v353 = vld [vmem:[%s334 + $0x90] sm:$0xff]
        %v354 = vld [vmem:[%s334 + $0x98] sm:$0xff]
        %v355 = vld [vmem:[%s334 + $0xa0] sm:$0xff]
        %v356 = vld [vmem:[%s334 + $0xa8] sm:$0xff]
        %v357 = vld [vmem:[%s334 + $0xb0] sm:$0xff]
        %v358 = vld [vmem:[%s334 + $0xb8] sm:$0xff]
        %v359 = vld [vmem:[%s334 + $0xc0] sm:$0xff]
        %v360 = vld [vmem:[%s334 + $0xc8] sm:$0xff]
        %v361 = vld [vmem:[%s334 + $0xd0] sm:$0xff]
        %v362 = vld [vmem:[%s334 + $0xd8] sm:$0xff]
        %v363 = vld [vmem:[%s334 + $0xe0] sm:$0xff]
        %v364 = vld [vmem:[%s334 + $0xe8] sm:$0xff]
        %v365 = vld [vmem:[%s334 + $0xf0] sm:$0xff]
        %v366 = vld [vmem:[%s334 + $0xf8] sm:$0xff]
        %vm367 = vcmask 261120
        %v369 = vsel %vm367, %v330, 0
        %371 = vmatprep.subr.mxu0 %v336
        %372 = vmatpush1.msra.mxu0 %v335
        %373 = vmatprep.subr.mxu0 %v344
        %374 = vmatpush1.msra.mxu0 %v343
        %375 = vmatprep.subr.mxu0 %v352
        %376 = vmatpush1.msra.mxu0 %v351
        %377 = vmatprep.subr.mxu0 %v360
        %378 = vmatpush1.msra.mxu0 %v359
        %379 = vmatprep.subr.mxu0 0.0
        %380 = vmatpush1.msra.mxu0 0.0
        %381 = vmatprep.subr.mxu0 0.0
        %382 = vmatpush1.msra.mxu0 0.0
        %383 = vmatprep.subr.mxu0 0.0
        %384 = vmatpush1.msra.mxu0 0.0
        %385 = vmatprep.subr.mxu0 0.0
        %386 = vmatpush1.msra.mxu0 0.0
        %387 = vmatprep.subr.mxu0 0.0
        %388 = vmatpush1.msra.mxu0 0.0
        %389 = vmatprep.subr.mxu0 0.0
        %390 = vmatpush1.msra.mxu0 0.0
        %391 = vmatprep.subr.mxu0 0.0
        %392 = vmatpush1.msra.mxu0 0.0
        %393 = vmatprep.subr.mxu0 0.0
        %394 = vmatpush1.msra.mxu0 0.0
        %395 = vmatprep.subr.mxu0 0.0
        %396 = vmatpush1.msra.mxu0 0.0
        %397 = vmatprep.subr.mxu0 0.0
        %398 = vmatpush1.msra.mxu0 0.0
        %399 = vmatprep.subr.mxu0 0.0
        %400 = vmatpush1.msra.mxu0 0.0
        %401 = vmatprep.subr.mxu0 0.0
        %402 = vmatpush1.msra.mxu0 0.0
        %403 = vmatprep.subr.mxu0 0.0
        %404 = vmatpush1.msra.mxu0 0.0
        %405 = vmatprep.subr.mxu0 0.0
        %406 = vmatpush1.msra.mxu0 0.0
        %407 = vmatprep.subr.mxu0 0.0
        %408 = vmatpush1.msra.mxu0 0.0
        %409 = vmatprep.subr.mxu0 0.0
        %410 = vmatpush1.msra.mxu0 0.0
        %411 = vmatprep.subr.mxu0 0.0
        %412 = vmatpush1.msra.mxu0 0.0
        %413 = vmatprep.subr.mxu0 0.0
        %414 = vmatpush1.msra.mxu0 0.0
        %415 = vmatprep.subr.mxu0 0.0
        %416 = vmatpush1.msra.mxu0 0.0
        %417 = vmatprep.subr.mxu0 0.0
        %418 = vmatpush1.msra.mxu0 0.0
        %419 = vmatprep.subr.mxu0 0.0
        %420 = vmatpush1.msra.mxu0 0.0
        %421 = vmatprep.subr.mxu0 0.0
        %422 = vmatpush1.msra.mxu0 0.0
        %423 = vmatprep.subr.mxu0 0.0
        %424 = vmatpush1.msra.mxu0 0.0
        %425 = vmatprep.subr.mxu0 0.0
        %426 = vmatpush1.msra.mxu0 0.0
        %427 = vmatprep.subr.mxu0 0.0
        %428 = vmatpush1.msra.mxu0 0.0
        %429 = vmatprep.subr.mxu0 0.0
        %430 = vmatpush1.msra.mxu0 0.0
        %431 = vmatprep.subr.mxu0 0.0
        %432 = vmatpush1.msra.mxu0 0.0
        %433 = vmatprep.subr.mxu0 0.0
        %434 = vmatpush1.msra.mxu0 0.0
        %435 = vmatprep.mubr.f32.mxu0 0.0
        %436 = vmatmul.mubr.f32.gmra.mrb[0].mxu0 %v369
        %v437 = vpop.f32.mrb[0].mxu0
        %v438 = vadd.f32 0.0, %v437
        %v439 = vpop.f32.mrb[0].mxu0
        %v440 = vadd.f32 0.0, %v439
        %441 = vdwg.mxu0
        %442 = vmatprep.subr.mxu0 %v338
        %443 = vmatpush1.msra.mxu0 %v337
        %444 = vmatprep.subr.mxu0 %v346
        %445 = vmatpush1.msra.mxu0 %v345
        %446 = vmatprep.subr.mxu0 %v354
        %447 = vmatpush1.msra.mxu0 %v353
        %448 = vmatprep.subr.mxu0 %v362
        %449 = vmatpush1.msra.mxu0 %v361
        %450 = vmatprep.subr.mxu0 0.0
        %451 = vmatpush1.msra.mxu0 0.0
        %452 = vmatprep.subr.mxu0 0.0
        %453 = vmatpush1.msra.mxu0 0.0
        %454 = vmatprep.subr.mxu0 0.0
        %455 = vmatpush1.msra.mxu0 0.0
        %456 = vmatprep.subr.mxu0 0.0
        %457 = vmatpush1.msra.mxu0 0.0
        %458 = vmatprep.subr.mxu0 0.0
        %459 = vmatpush1.msra.mxu0 0.0
        %460 = vmatprep.subr.mxu0 0.0
        %461 = vmatpush1.msra.mxu0 0.0
        %462 = vmatprep.subr.mxu0 0.0
        %463 = vmatpush1.msra.mxu0 0.0
        %464 = vmatprep.subr.mxu0 0.0
        %465 = vmatpush1.msra.mxu0 0.0
        %466 = vmatprep.subr.mxu0 0.0
        %467 = vmatpush1.msra.mxu0 0.0
        %468 = vmatprep.subr.mxu0 0.0
        %469 = vmatpush1.msra.mxu0 0.0
        %470 = vmatprep.subr.mxu0 0.0
        %471 = vmatpush1.msra.mxu0 0.0
        %472 = vmatprep.subr.mxu0 0.0
        %473 = vmatpush1.msra.mxu0 0.0
        %474 = vmatprep.subr.mxu0 0.0
        %475 = vmatpush1.msra.mxu0 0.0
        %476 = vmatprep.subr.mxu0 0.0
        %477 = vmatpush1.msra.mxu0 0.0
        %478 = vmatprep.subr.mxu0 0.0
        %479 = vmatpush1.msra.mxu0 0.0
        %480 = vmatprep.subr.mxu0 0.0
        %481 = vmatpush1.msra.mxu0 0.0
        %482 = vmatprep.subr.mxu0 0.0
        %483 = vmatpush1.msra.mxu0 0.0
        %484 = vmatprep.subr.mxu0 0.0
        %485 = vmatpush1.msra.mxu0 0.0
        %486 = vmatprep.subr.mxu0 0.0
        %487 = vmatpush1.msra.mxu0 0.0
        %488 = vmatprep.subr.mxu0 0.0
        %489 = vmatpush1.msra.mxu0 0.0
        %490 = vmatprep.subr.mxu0 0.0
        %491 = vmatpush1.msra.mxu0 0.0
        %492 = vmatprep.subr.mxu0 0.0
        %493 = vmatpush1.msra.mxu0 0.0
        %494 = vmatprep.subr.mxu0 0.0
        %495 = vmatpush1.msra.mxu0 0.0
        %496 = vmatprep.subr.mxu0 0.0
        %497 = vmatpush1.msra.mxu0 0.0
        %498 = vmatprep.subr.mxu0 0.0
        %499 = vmatpush1.msra.mxu0 0.0
        %500 = vmatprep.subr.mxu0 0.0
        %501 = vmatpush1.msra.mxu0 0.0
        %502 = vmatprep.subr.mxu0 0.0
        %503 = vmatpush1.msra.mxu0 0.0
        %504 = vmatprep.subr.mxu0 0.0
        %505 = vmatpush1.msra.mxu0 0.0
        %506 = vmatprep.mubr.f32.mxu0 0.0
        %507 = vmatmul.mubr.f32.gmra.mrb[0].mxu0 %v369
        %v508 = vpop.f32.mrb[0].mxu0
        %v509 = vadd.f32 0.0, %v508
        %v510 = vpop.f32.mrb[0].mxu0
        %v511 = vadd.f32 0.0, %v510
        %512 = vdwg.mxu0
        %513 = vmatprep.subr.mxu0 %v340
        %514 = vmatpush1.msra.mxu0 %v339
        %515 = vmatprep.subr.mxu0 %v348
        %516 = vmatpush1.msra.mxu0 %v347
        %517 = vmatprep.subr.mxu0 %v356
        %518 = vmatpush1.msra.mxu0 %v355
        %519 = vmatprep.subr.mxu0 %v364
        %520 = vmatpush1.msra.mxu0 %v363
        %521 = vmatprep.subr.mxu0 0.0
        %522 = vmatpush1.msra.mxu0 0.0
        %523 = vmatprep.subr.mxu0 0.0
        %524 = vmatpush1.msra.mxu0 0.0
        %525 = vmatprep.subr.mxu0 0.0
        %526 = vmatpush1.msra.mxu0 0.0
        %527 = vmatprep.subr.mxu0 0.0
        %528 = vmatpush1.msra.mxu0 0.0
        %529 = vmatprep.subr.mxu0 0.0
        %530 = vmatpush1.msra.mxu0 0.0
        %531 = vmatprep.subr.mxu0 0.0
        %532 = vmatpush1.msra.mxu0 0.0
        %533 = vmatprep.subr.mxu0 0.0
        %534 = vmatpush1.msra.mxu0 0.0
        %535 = vmatprep.subr.mxu0 0.0
        %536 = vmatpush1.msra.mxu0 0.0
        %537 = vmatprep.subr.mxu0 0.0
        %538 = vmatpush1.msra.mxu0 0.0
        %539 = vmatprep.subr.mxu0 0.0
        %540 = vmatpush1.msra.mxu0 0.0
        %541 = vmatprep.subr.mxu0 0.0
        %542 = vmatpush1.msra.mxu0 0.0
        %543 = vmatprep.subr.mxu0 0.0
        %544 = vmatpush1.msra.mxu0 0.0
        %545 = vmatprep.subr.mxu0 0.0
        %546 = vmatpush1.msra.mxu0 0.0
        %547 = vmatprep.subr.mxu0 0.0
        %548 = vmatpush1.msra.mxu0 0.0
        %549 = vmatprep.subr.mxu0 0.0
        %550 = vmatpush1.msra.mxu0 0.0
        %551 = vmatprep.subr.mxu0 0.0
        %552 = vmatpush1.msra.mxu0 0.0
        %553 = vmatprep.subr.mxu0 0.0
        %554 = vmatpush1.msra.mxu0 0.0
        %555 = vmatprep.subr.mxu0 0.0
        %556 = vmatpush1.msra.mxu0 0.0
        %557 = vmatprep.subr.mxu0 0.0
        %558 = vmatpush1.msra.mxu0 0.0
        %559 = vmatprep.subr.mxu0 0.0
        %560 = vmatpush1.msra.mxu0 0.0
        %561 = vmatprep.subr.mxu0 0.0
        %562 = vmatpush1.msra.mxu0 0.0
        %563 = vmatprep.subr.mxu0 0.0
        %564 = vmatpush1.msra.mxu0 0.0
        %565 = vmatprep.subr.mxu0 0.0
        %566 = vmatpush1.msra.mxu0 0.0
        %567 = vmatprep.subr.mxu0 0.0
        %568 = vmatpush1.msra.mxu0 0.0
        %569 = vmatprep.subr.mxu0 0.0
        %570 = vmatpush1.msra.mxu0 0.0
        %571 = vmatprep.subr.mxu0 0.0
        %572 = vmatpush1.msra.mxu0 0.0
        %573 = vmatprep.subr.mxu0 0.0
        %574 = vmatpush1.msra.mxu0 0.0
        %575 = vmatprep.subr.mxu0 0.0
        %576 = vmatpush1.msra.mxu0 0.0
        %577 = vmatprep.mubr.f32.mxu0 0.0
        %578 = vmatmul.mubr.f32.gmra.mrb[0].mxu0 %v369
        %v579 = vpop.f32.mrb[0].mxu0
        %v580 = vadd.f32 0.0, %v579
        %v581 = vpop.f32.mrb[0].mxu0
        %v582 = vadd.f32 0.0, %v581
        %583 = vdwg.mxu0
        %584 = vmatprep.subr.mxu0 %v342
        %585 = vmatpush1.msra.mxu0 %v341
        %586 = vmatprep.subr.mxu0 %v350
        %587 = vmatpush1.msra.mxu0 %v349
        %588 = vmatprep.subr.mxu0 %v358
        %589 = vmatpush1.msra.mxu0 %v357
        %590 = vmatprep.subr.mxu0 %v366
        %591 = vmatpush1.msra.mxu0 %v365
        %592 = vmatprep.subr.mxu0 0.0
        %593 = vmatpush1.msra.mxu0 0.0
        %594 = vmatprep.subr.mxu0 0.0
        %595 = vmatpush1.msra.mxu0 0.0
        %596 = vmatprep.subr.mxu0 0.0
        %597 = vmatpush1.msra.mxu0 0.0
        %598 = vmatprep.subr.mxu0 0.0
        %599 = vmatpush1.msra.mxu0 0.0
        %600 = vmatprep.subr.mxu0 0.0
        %601 = vmatpush1.msra.mxu0 0.0
        %602 = vmatprep.subr.mxu0 0.0
        %603 = vmatpush1.msra.mxu0 0.0
        %604 = vmatprep.subr.mxu0 0.0
        %605 = vmatpush1.msra.mxu0 0.0
        %606 = vmatprep.subr.mxu0 0.0
        %607 = vmatpush1.msra.mxu0 0.0
        %608 = vmatprep.subr.mxu0 0.0
        %609 = vmatpush1.msra.mxu0 0.0
        %610 = vmatprep.subr.mxu0 0.0
        %611 = vmatpush1.msra.mxu0 0.0
        %612 = vmatprep.subr.mxu0 0.0
        %613 = vmatpush1.msra.mxu0 0.0
        %614 = vmatprep.subr.mxu0 0.0
        %615 = vmatpush1.msra.mxu0 0.0
        %616 = vmatprep.subr.mxu0 0.0
        %617 = vmatpush1.msra.mxu0 0.0
        %618 = vmatprep.subr.mxu0 0.0
        %619 = vmatpush1.msra.mxu0 0.0
        %620 = vmatprep.subr.mxu0 0.0
        %621 = vmatpush1.msra.mxu0 0.0
        %622 = vmatprep.subr.mxu0 0.0
        %623 = vmatpush1.msra.mxu0 0.0
        %624 = vmatprep.subr.mxu0 0.0
        %625 = vmatpush1.msra.mxu0 0.0
        %626 = vmatprep.subr.mxu0 0.0
        %627 = vmatpush1.msra.mxu0 0.0
        %628 = vmatprep.subr.mxu0 0.0
        %629 = vmatpush1.msra.mxu0 0.0
        %630 = vmatprep.subr.mxu0 0.0
        %631 = vmatpush1.msra.mxu0 0.0
        %632 = vmatprep.subr.mxu0 0.0
        %633 = vmatpush1.msra.mxu0 0.0
        %634 = vmatprep.subr.mxu0 0.0
        %635 = vmatpush1.msra.mxu0 0.0
        %636 = vmatprep.subr.mxu0 0.0
        %637 = vmatpush1.msra.mxu0 0.0
        %638 = vmatprep.subr.mxu0 0.0
        %639 = vmatpush1.msra.mxu0 0.0
        %640 = vmatprep.subr.mxu0 0.0
        %641 = vmatpush1.msra.mxu0 0.0
        %642 = vmatprep.subr.mxu0 0.0
        %643 = vmatpush1.msra.mxu0 0.0
        %644 = vmatprep.subr.mxu0 0.0
        %645 = vmatpush1.msra.mxu0 0.0
        %646 = vmatprep.subr.mxu0 0.0
        %647 = vmatpush1.msra.mxu0 0.0
        %648 = vmatprep.mubr.f32.mxu0 0.0
        %649 = vmatmul.mubr.f32.gmra.mrb[0].mxu0 %v369
        %v650 = vpop.f32.mrb[0].mxu0
        %v651 = vadd.f32 0.0, %v650
        %v652 = vpop.f32.mrb[0].mxu0
        %v653 = vadd.f32 0.0, %v652
        %654 = vdwg.mxu0
        %s655 = scalar_lea.vmem [#allocation8], %s331
        %v656 = vld [vmem:[%s655] sm:$0xff]
        %s657 = scalar_lea.vmem %s3, %s331
        %v658 = vld [vmem:[%s657] sm:$0xff]
        %v659 = vmul.f32 %v438, 2.0
        %v660 = vmul.f32 %v440, 2.0
        %v661 = vmul.f32 %v509, 2.0
        %v662 = vmul.f32 %v511, 2.0
        %v663 = vmul.f32 %v580, 2.0
        %v664 = vmul.f32 %v582, 2.0
        %v665 = vmul.f32 %v651, 2.0
        %v666 = vmul.f32 %v653, 2.0
        %v668 = vlaneseq
        %v669 = vshrl.u32 %v668, 7
        %v670 = vsub.s32 0, %v669
        %v671 = vrot.slane %v656, %v670
        %v672 = vlaneseq
        %v673 = vshrl.u32 %v672, 7
        %v674 = vsub.s32 1, %v673
        %v675 = vrot.slane %v656, %v674
        %v676 = vlaneseq
        %v677 = vshrl.u32 %v676, 7
        %v678 = vsub.s32 2, %v677
        %v679 = vrot.slane %v656, %v678
        %v680 = vlaneseq
        %v681 = vshrl.u32 %v680, 7
        %v682 = vsub.s32 3, %v681
        %v683 = vrot.slane %v656, %v682
        %v684 = vlaneseq
        %v685 = vshrl.u32 %v684, 7
        %v686 = vsub.s32 4, %v685
        %v687 = vrot.slane %v656, %v686
        %v688 = vlaneseq
        %v689 = vshrl.u32 %v688, 7
        %v690 = vsub.s32 5, %v689
        %v691 = vrot.slane %v656, %v690
        %v692 = vlaneseq
        %v693 = vshrl.u32 %v692, 7
        %v694 = vsub.s32 6, %v693
        %v695 = vrot.slane %v656, %v694
        %v696 = vlaneseq
        %v697 = vshrl.u32 %v696, 7
        %v698 = vsub.s32 7, %v697
        %v699 = vrot.slane %v656, %v698
        %v708 = vadd.f32 %v659, %v671
        %v709 = vadd.f32 %v660, %v675
        %v710 = vadd.f32 %v661, %v679
        %v711 = vadd.f32 %v662, %v683
        %v712 = vadd.f32 %v663, %v687
        %v713 = vadd.f32 %v664, %v691
        %v714 = vadd.f32 %v665, %v695
        %v715 = vadd.f32 %v666, %v699
        %v716 = vand.u32 2147483647, %v708
        %vm717 = vcmp.le.f32.partialorder %v716, 0.7853982
        %vm718 = vcmp.lt.s32.totalorder %v708, 0
        %v719 = vand.u32 %v708, 2139095040
        %v720 = vshrl.u32 %v719, 23
        %v721 = vsub.s32 %v720, 127
        %v722 = vand.u32 2147483647, %v708
        %v723 = vand.u32 %v722, 8388607
        %v724 = vor.u32 %v723, 8388608
        %v725 = vsub.s32 0, %v724
        %v726 = vadd.s32 %v721, 1
        %vm727 = vcmp.gt.s32.totalorder %v726, 0
        %v728 = vsel %vm727, %v726, 0
        %v729 = vshrl.u32 %v728, 5
        %v730 = vand.u32 %v728, 31
        %v731 = vsub.s32 32, %v730
        %v732 = vshrl.u32 683565275, %v731
        %v733 = vshll.u32 683565275, %v730
        %v734 = vshrl.u32 2475754826, %v731
        %v735 = vor.u32 %v733, %v734
        %v736 = vshll.u32 2475754826, %v730
        %v737 = vshrl.u32 2131351028, %v731
        %v738 = vor.u32 %v736, %v737
        %v739 = vshll.u32 2131351028, %v730
        %v740 = vshrl.u32 2102212464, %v731
        %v741 = vor.u32 %v739, %v740
        %v742 = vshll.u32 2102212464, %v730
        %v743 = vshrl.u32 920167782, %v731
        %v744 = vor.u32 %v742, %v743
        %v745 = vshll.u32 920167782, %v730
        %v746 = vshrl.u32 1326507024, %v731
        %v747 = vor.u32 %v745, %v746
        %vm748 = vcmp.lt.s32.totalorder %v729, 1
        %vm749 = vcmp.lt.s32.totalorder %v729, 2
        %vm750 = vcmp.lt.s32.totalorder %v729, 3
        %vm751 = vcmp.lt.s32.totalorder %v729, 4
        %v752 = vsel %vm748, %v732, %v735
        %v753 = vsel %vm751, %v741, 2102212464
        %v754 = vsel %vm750, %v738, %v753
        %v755 = vsel %vm749, %v752, %v754
        %v756 = vsel %vm748, %v735, %v738
        %v757 = vsel %vm751, %v744, 920167782
        %v758 = vsel %vm750, %v741, %v757
        %v759 = vsel %vm749, %v756, %v758
        %v760 = vsel %vm748, %v738, %v741
        %v761 = vsel %vm751, %v747, 1326507024
        %v762 = vsel %vm750, %v744, %v761
        %v763 = vsel %vm749, %v760, %v762
        %v764 = vshll.u32 %v724, 8
        %v765 = vmul.u32.u64.compose %v764, %v763
        %v766 = vextract.low.u32 %v765
        %v767 = vextract.high.u32 %v765
        %v768 = vmul.u32.u64.compose %v764, %v759
        %v769 = vextract.low.u32 %v768
        %v770 = vextract.high.u32 %v768
        %v771 = vmul.u32 %v764, %v755
        %v772 = vadd.s32 %v767, %v769
        %vm773 = vc.u32 %v767, %v769
        %v774 = vadd.s32 %v770, 1
        %v775 = vsel %vm773, %v774, %v770
        %v776 = vadd.s32 %v771, %v775
        %v777 = vadd.s32 %v776, 536870912
        %v778 = vshrl.u32 %v777, 30
        %v779 = vshll.u32 %v778, 30
        %v780 = vsub.s32 %v776, %v779
        %vm781 = vcmp.lt.s32.totalorder %v780, 0
        %v782 = vsub.s32 0, %v780
        %v783 = vsel %vm781, %v782, %v780
        %v784 = vclz %v783
        %v785 = vsub.s32 %v784, 2
        %vm786 = vcmp.gt.s32.totalorder 0, %v785
        %v787 = vsel %vm786, 0, %v785
        %v788 = vsub.s32 32, %v787
        %v789 = vshll.u32 %v780, %v787
        %v790 = vshrl.u32 %v772, %v788
        %v791 = vor.u32 %v789, %v790
        %v792 = vsub.s32 4294967266, %v787
        %v793 = vadd.s32 %v792, 127
        %v794 = vshll.u32 %v793, 23
        %v795 = vor.u32 4788187, %v794
        %v796 = vand.u32 2147483647, %v795
        %v798 = vcvt.s32.f32 %v791
        %v799 = vmul.f32 %v798, %v796
        %v800 = vxor.u32 %v799, 2147483648
        %v801 = vsel %vm718, %v800, %v799
        %v802 = vsub.s32 4, %v778
        %v803 = vsel %vm718, %v802, %v778
        %v804 = vsel %vm717, %v708, %v801
        %v805 = vsel %vm717, 0, %v803
        %v806 = vcosq.f32.pop %v804
        %v807 = vsinq.f32.pop %v804
        %vm808 = vweird.f32 %v708
        %v809 = vadd.s32 %v805, 3
        %v810 = vand.u32 %v809, 3
        %vm811 = vcmp.lt.s32.totalorder %v810, 2
        %vm812 = vcmp.eq.s32.totalorder %v810, 0
        %v813 = vxor.u32 %v807, 2147483648
        %v814 = vsel %vm812, %v806, %v813
        %vm815 = vcmp.eq.s32.totalorder %v810, 2
        %v816 = vxor.u32 %v806, 2147483648
        %v817 = vsel %vm815, %v816, %v807
        %v818 = vsel %vm811, %v814, %v817
        %v819 = vsel %vm808, nan, %v818
        %v820 = vand.u32 2147483647, %v709
        %vm821 = vcmp.le.f32.partialorder %v820, 0.7853982
        %vm822 = vcmp.lt.s32.totalorder %v709, 0
        %v823 = vand.u32 %v709, 2139095040
        %v824 = vshrl.u32 %v823, 23
        %v825 = vsub.s32 %v824, 127
        %v826 = vand.u32 2147483647, %v709
        %v827 = vand.u32 %v826, 8388607
        %v828 = vor.u32 %v827, 8388608
        %v829 = vsub.s32 0, %v828
        %v830 = vadd.s32 %v825, 1
        %vm831 = vcmp.gt.s32.totalorder %v830, 0
        %v832 = vsel %vm831, %v830, 0
        %v833 = vshrl.u32 %v832, 5
        %v834 = vand.u32 %v832, 31
        %v835 = vsub.s32 32, %v834
        %v836 = vshrl.u32 683565275, %v835
        %v837 = vshll.u32 683565275, %v834
        %v838 = vshrl.u32 2475754826, %v835
        %v839 = vor.u32 %v837, %v838
        %v840 = vshll.u32 2475754826, %v834
        %v841 = vshrl.u32 2131351028, %v835
        %v842 = vor.u32 %v840, %v841
        %v843 = vshll.u32 2131351028, %v834
        %v844 = vshrl.u32 2102212464, %v835
        %v845 = vor.u32 %v843, %v844
        %v846 = vshll.u32 2102212464, %v834
        %v847 = vshrl.u32 920167782, %v835
        %v848 = vor.u32 %v846, %v847
        %v849 = vshll.u32 920167782, %v834
        %v850 = vshrl.u32 1326507024, %v835
        %v851 = vor.u32 %v849, %v850
        %vm852 = vcmp.lt.s32.totalorder %v833, 1
        %vm853 = vcmp.lt.s32.totalorder %v833, 2
        %vm854 = vcmp.lt.s32.totalorder %v833, 3
        %vm855 = vcmp.lt.s32.totalorder %v833, 4
        %v856 = vsel %vm852, %v836, %v839
        %v857 = vsel %vm855, %v845, 2102212464
        %v858 = vsel %vm854, %v842, %v857
        %v859 = vsel %vm853, %v856, %v858
        %v860 = vsel %vm852, %v839, %v842
        %v861 = vsel %vm855, %v848, 920167782
        %v862 = vsel %vm854, %v845, %v861
        %v863 = vsel %vm853, %v860, %v862
        %v864 = vsel %vm852, %v842, %v845
        %v865 = vsel %vm855, %v851, 1326507024
        %v866 = vsel %vm854, %v848, %v865
        %v867 = vsel %vm853, %v864, %v866
        %v868 = vshll.u32 %v828, 8
        %v869 = vmul.u32.u64.compose %v868, %v867
        %v870 = vextract.low.u32 %v869
        %v871 = vextract.high.u32 %v869
        %v872 = vmul.u32.u64.compose %v868, %v863
        %v873 = vextract.low.u32 %v872
        %v874 = vextract.high.u32 %v872
        %v875 = vmul.u32 %v868, %v859
        %v876 = vadd.s32 %v871, %v873
        %vm877 = vc.u32 %v871, %v873
        %v878 = vadd.s32 %v874, 1
        %v879 = vsel %vm877, %v878, %v874
        %v880 = vadd.s32 %v875, %v879
        %v881 = vadd.s32 %v880, 536870912
        %v882 = vshrl.u32 %v881, 30
        %v883 = vshll.u32 %v882, 30
        %v884 = vsub.s32 %v880, %v883
        %vm885 = vcmp.lt.s32.totalorder %v884, 0
        %v886 = vsub.s32 0, %v884
        %v887 = vsel %vm885, %v886, %v884
        %v888 = vclz %v887
        %v889 = vsub.s32 %v888, 2
        %vm890 = vcmp.gt.s32.totalorder 0, %v889
        %v891 = vsel %vm890, 0, %v889
        %v892 = vsub.s32 32, %v891
        %v893 = vshll.u32 %v884, %v891
        %v894 = vshrl.u32 %v876, %v892
        %v895 = vor.u32 %v893, %v894
        %v896 = vsub.s32 4294967266, %v891
        %v897 = vadd.s32 %v896, 127
        %v898 = vshll.u32 %v897, 23
        %v899 = vor.u32 4788187, %v898
        %v900 = vand.u32 2147483647, %v899
        %v902 = vcvt.s32.f32 %v895
        %v903 = vmul.f32 %v902, %v900
        %v904 = vxor.u32 %v903, 2147483648
        %v905 = vsel %vm822, %v904, %v903
        %v906 = vsub.s32 4, %v882
        %v907 = vsel %vm822, %v906, %v882
        %v908 = vsel %vm821, %v709, %v905
        %v909 = vsel %vm821, 0, %v907
        %v910 = vcosq.f32.pop %v908
        %v911 = vsinq.f32.pop %v908
        %vm912 = vweird.f32 %v709
        %v913 = vadd.s32 %v909, 3
        %v914 = vand.u32 %v913, 3
        %vm915 = vcmp.lt.s32.totalorder %v914, 2
        %vm916 = vcmp.eq.s32.totalorder %v914, 0
        %v917 = vxor.u32 %v911, 2147483648
        %v918 = vsel %vm916, %v910, %v917
        %vm919 = vcmp.eq.s32.totalorder %v914, 2
        %v920 = vxor.u32 %v910, 2147483648
        %v921 = vsel %vm919, %v920, %v911
        %v922 = vsel %vm915, %v918, %v921
        %v923 = vsel %vm912, nan, %v922
        %v924 = vand.u32 2147483647, %v710
        %vm925 = vcmp.le.f32.partialorder %v924, 0.7853982
        %vm926 = vcmp.lt.s32.totalorder %v710, 0
        %v927 = vand.u32 %v710, 2139095040
        %v928 = vshrl.u32 %v927, 23
        %v929 = vsub.s32 %v928, 127
        %v930 = vand.u32 2147483647, %v710
        %v931 = vand.u32 %v930, 8388607
        %v932 = vor.u32 %v931, 8388608
        %v933 = vsub.s32 0, %v932
        %v934 = vadd.s32 %v929, 1
        %vm935 = vcmp.gt.s32.totalorder %v934, 0
        %v936 = vsel %vm935, %v934, 0
        %v937 = vshrl.u32 %v936, 5
        %v938 = vand.u32 %v936, 31
        %v939 = vsub.s32 32, %v938
        %v940 = vshrl.u32 683565275, %v939
        %v941 = vshll.u32 683565275, %v938
        %v942 = vshrl.u32 2475754826, %v939
        %v943 = vor.u32 %v941, %v942
        %v944 = vshll.u32 2475754826, %v938
        %v945 = vshrl.u32 2131351028, %v939
        %v946 = vor.u32 %v944, %v945
        %v947 = vshll.u32 2131351028, %v938
        %v948 = vshrl.u32 2102212464, %v939
        %v949 = vor.u32 %v947, %v948
        %v950 = vshll.u32 2102212464, %v938
        %v951 = vshrl.u32 920167782, %v939
        %v952 = vor.u32 %v950, %v951
        %v953 = vshll.u32 920167782, %v938
        %v954 = vshrl.u32 1326507024, %v939
        %v955 = vor.u32 %v953, %v954
        %vm956 = vcmp.lt.s32.totalorder %v937, 1
        %vm957 = vcmp.lt.s32.totalorder %v937, 2
        %vm958 = vcmp.lt.s32.totalorder %v937, 3
        %vm959 = vcmp.lt.s32.totalorder %v937, 4
        %v960 = vsel %vm956, %v940, %v943
        %v961 = vsel %vm959, %v949, 2102212464
        %v962 = vsel %vm958, %v946, %v961
        %v963 = vsel %vm957, %v960, %v962
        %v964 = vsel %vm956, %v943, %v946
        %v965 = vsel %vm959, %v952, 920167782
        %v966 = vsel %vm958, %v949, %v965
        %v967 = vsel %vm957, %v964, %v966
        %v968 = vsel %vm956, %v946, %v949
        %v969 = vsel %vm959, %v955, 1326507024
        %v970 = vsel %vm958, %v952, %v969
        %v971 = vsel %vm957, %v968, %v970
        %v972 = vshll.u32 %v932, 8
        %v973 = vmul.u32.u64.compose %v972, %v971
        %v974 = vextract.low.u32 %v973
        %v975 = vextract.high.u32 %v973
        %v976 = vmul.u32.u64.compose %v972, %v967
        %v977 = vextract.low.u32 %v976
        %v978 = vextract.high.u32 %v976
        %v979 = vmul.u32 %v972, %v963
        %v980 = vadd.s32 %v975, %v977
        %vm981 = vc.u32 %v975, %v977
        %v982 = vadd.s32 %v978, 1
        %v983 = vsel %vm981, %v982, %v978
        %v984 = vadd.s32 %v979, %v983
        %v985 = vadd.s32 %v984, 536870912
        %v986 = vshrl.u32 %v985, 30
        %v987 = vshll.u32 %v986, 30
        %v988 = vsub.s32 %v984, %v987
        %vm989 = vcmp.lt.s32.totalorder %v988, 0
        %v990 = vsub.s32 0, %v988
        %v991 = vsel %vm989, %v990, %v988
        %v992 = vclz %v991
        %v993 = vsub.s32 %v992, 2
        %vm994 = vcmp.gt.s32.totalorder 0, %v993
        %v995 = vsel %vm994, 0, %v993
        %v996 = vsub.s32 32, %v995
        %v997 = vshll.u32 %v988, %v995
        %v998 = vshrl.u32 %v980, %v996
        %v999 = vor.u32 %v997, %v998
        %v1000 = vsub.s32 4294967266, %v995
        %v1001 = vadd.s32 %v1000, 127
        %v1002 = vshll.u32 %v1001, 23
        %v1003 = vor.u32 4788187, %v1002
        %v1004 = vand.u32 2147483647, %v1003
        %v1006 = vcvt.s32.f32 %v999
        %v1007 = vmul.f32 %v1006, %v1004
        %v1008 = vxor.u32 %v1007, 2147483648
        %v1009 = vsel %vm926, %v1008, %v1007
        %v1010 = vsub.s32 4, %v986
        %v1011 = vsel %vm926, %v1010, %v986
        %v1012 = vsel %vm925, %v710, %v1009
        %v1013 = vsel %vm925, 0, %v1011
        %v1014 = vcosq.f32.pop %v1012
        %v1015 = vsinq.f32.pop %v1012
        %vm1016 = vweird.f32 %v710
        %v1017 = vadd.s32 %v1013, 3
        %v1018 = vand.u32 %v1017, 3
        %vm1019 = vcmp.lt.s32.totalorder %v1018, 2
        %vm1020 = vcmp.eq.s32.totalorder %v1018, 0
        %v1021 = vxor.u32 %v1015, 2147483648
        %v1022 = vsel %vm1020, %v1014, %v1021
        %vm1023 = vcmp.eq.s32.totalorder %v1018, 2
        %v1024 = vxor.u32 %v1014, 2147483648
        %v1025 = vsel %vm1023, %v1024, %v1015
        %v1026 = vsel %vm1019, %v1022, %v1025
        %v1027 = vsel %vm1016, nan, %v1026
        %v1028 = vand.u32 2147483647, %v711
        %vm1029 = vcmp.le.f32.partialorder %v1028, 0.7853982
        %vm1030 = vcmp.lt.s32.totalorder %v711, 0
        %v1031 = vand.u32 %v711, 2139095040
        %v1032 = vshrl.u32 %v1031, 23
        %v1033 = vsub.s32 %v1032, 127
        %v1034 = vand.u32 2147483647, %v711
        %v1035 = vand.u32 %v1034, 8388607
        %v1036 = vor.u32 %v1035, 8388608
        %v1037 = vsub.s32 0, %v1036
        %v1038 = vadd.s32 %v1033, 1
        %vm1039 = vcmp.gt.s32.totalorder %v1038, 0
        %v1040 = vsel %vm1039, %v1038, 0
        %v1041 = vshrl.u32 %v1040, 5
        %v1042 = vand.u32 %v1040, 31
        %v1043 = vsub.s32 32, %v1042
        %v1044 = vshrl.u32 683565275, %v1043
        %v1045 = vshll.u32 683565275, %v1042
        %v1046 = vshrl.u32 2475754826, %v1043
        %v1047 = vor.u32 %v1045, %v1046
        %v1048 = vshll.u32 2475754826, %v1042
        %v1049 = vshrl.u32 2131351028, %v1043
        %v1050 = vor.u32 %v1048, %v1049
        %v1051 = vshll.u32 2131351028, %v1042
        %v1052 = vshrl.u32 2102212464, %v1043
        %v1053 = vor.u32 %v1051, %v1052
        %v1054 = vshll.u32 2102212464, %v1042
        %v1055 = vshrl.u32 920167782, %v1043
        %v1056 = vor.u32 %v1054, %v1055
        %v1057 = vshll.u32 920167782, %v1042
        %v1058 = vshrl.u32 1326507024, %v1043
        %v1059 = vor.u32 %v1057, %v1058
        %vm1060 = vcmp.lt.s32.totalorder %v1041, 1
        %vm1061 = vcmp.lt.s32.totalorder %v1041, 2
        %vm1062 = vcmp.lt.s32.totalorder %v1041, 3
        %vm1063 = vcmp.lt.s32.totalorder %v1041, 4
        %v1064 = vsel %vm1060, %v1044, %v1047
        %v1065 = vsel %vm1063, %v1053, 2102212464
        %v1066 = vsel %vm1062, %v1050, %v1065
        %v1067 = vsel %vm1061, %v1064, %v1066
        %v1068 = vsel %vm1060, %v1047, %v1050
        %v1069 = vsel %vm1063, %v1056, 920167782
        %v1070 = vsel %vm1062, %v1053, %v1069
        %v1071 = vsel %vm1061, %v1068, %v1070
        %v1072 = vsel %vm1060, %v1050, %v1053
        %v1073 = vsel %vm1063, %v1059, 1326507024
        %v1074 = vsel %vm1062, %v1056, %v1073
        %v1075 = vsel %vm1061, %v1072, %v1074
        %v1076 = vshll.u32 %v1036, 8
        %v1077 = vmul.u32.u64.compose %v1076, %v1075
        %v1078 = vextract.low.u32 %v1077
        %v1079 = vextract.high.u32 %v1077
        %v1080 = vmul.u32.u64.compose %v1076, %v1071
        %v1081 = vextract.low.u32 %v1080
        %v1082 = vextract.high.u32 %v1080
        %v1083 = vmul.u32 %v1076, %v1067
        %v1084 = vadd.s32 %v1079, %v1081
        %vm1085 = vc.u32 %v1079, %v1081
        %v1086 = vadd.s32 %v1082, 1
        %v1087 = vsel %vm1085, %v1086, %v1082
        %v1088 = vadd.s32 %v1083, %v1087
        %v1089 = vadd.s32 %v1088, 536870912
        %v1090 = vshrl.u32 %v1089, 30
        %v1091 = vshll.u32 %v1090, 30
        %v1092 = vsub.s32 %v1088, %v1091
        %vm1093 = vcmp.lt.s32.totalorder %v1092, 0
        %v1094 = vsub.s32 0, %v1092
        %v1095 = vsel %vm1093, %v1094, %v1092
        %v1096 = vclz %v1095
        %v1097 = vsub.s32 %v1096, 2
        %vm1098 = vcmp.gt.s32.totalorder 0, %v1097
        %v1099 = vsel %vm1098, 0, %v1097
        %v1100 = vsub.s32 32, %v1099
        %v1101 = vshll.u32 %v1092, %v1099
        %v1102 = vshrl.u32 %v1084, %v1100
        %v1103 = vor.u32 %v1101, %v1102
        %v1104 = vsub.s32 4294967266, %v1099
        %v1105 = vadd.s32 %v1104, 127
        %v1106 = vshll.u32 %v1105, 23
        %v1107 = vor.u32 4788187, %v1106
        %v1108 = vand.u32 2147483647, %v1107
        %v1110 = vcvt.s32.f32 %v1103
        %v1111 = vmul.f32 %v1110, %v1108
        %v1112 = vxor.u32 %v1111, 2147483648
        %v1113 = vsel %vm1030, %v1112, %v1111
        %v1114 = vsub.s32 4, %v1090
        %v1115 = vsel %vm1030, %v1114, %v1090
        %v1116 = vsel %vm1029, %v711, %v1113
        %v1117 = vsel %vm1029, 0, %v1115
        %v1118 = vcosq.f32.pop %v1116
        %v1119 = vsinq.f32.pop %v1116
        %vm1120 = vweird.f32 %v711
        %v1121 = vadd.s32 %v1117, 3
        %v1122 = vand.u32 %v1121, 3
        %vm1123 = vcmp.lt.s32.totalorder %v1122, 2
        %vm1124 = vcmp.eq.s32.totalorder %v1122, 0
        %v1125 = vxor.u32 %v1119, 2147483648
        %v1126 = vsel %vm1124, %v1118, %v1125
        %vm1127 = vcmp.eq.s32.totalorder %v1122, 2
        %v1128 = vxor.u32 %v1118, 2147483648
        %v1129 = vsel %vm1127, %v1128, %v1119
        %v1130 = vsel %vm1123, %v1126, %v1129
        %v1131 = vsel %vm1120, nan, %v1130
        %v1132 = vand.u32 2147483647, %v712
        %vm1133 = vcmp.le.f32.partialorder %v1132, 0.7853982
        %vm1134 = vcmp.lt.s32.totalorder %v712, 0
        %v1135 = vand.u32 %v712, 2139095040
        %v1136 = vshrl.u32 %v1135, 23
        %v1137 = vsub.s32 %v1136, 127
        %v1138 = vand.u32 2147483647, %v712
        %v1139 = vand.u32 %v1138, 8388607
        %v1140 = vor.u32 %v1139, 8388608
        %v1141 = vsub.s32 0, %v1140
        %v1142 = vadd.s32 %v1137, 1
        %vm1143 = vcmp.gt.s32.totalorder %v1142, 0
        %v1144 = vsel %vm1143, %v1142, 0
        %v1145 = vshrl.u32 %v1144, 5
        %v1146 = vand.u32 %v1144, 31
        %v1147 = vsub.s32 32, %v1146
        %v1148 = vshrl.u32 683565275, %v1147
        %v1149 = vshll.u32 683565275, %v1146
        %v1150 = vshrl.u32 2475754826, %v1147
        %v1151 = vor.u32 %v1149, %v1150
        %v1152 = vshll.u32 2475754826, %v1146
        %v1153 = vshrl.u32 2131351028, %v1147
        %v1154 = vor.u32 %v1152, %v1153
        %v1155 = vshll.u32 2131351028, %v1146
        %v1156 = vshrl.u32 2102212464, %v1147
        %v1157 = vor.u32 %v1155, %v1156
        %v1158 = vshll.u32 2102212464, %v1146
        %v1159 = vshrl.u32 920167782, %v1147
        %v1160 = vor.u32 %v1158, %v1159
        %v1161 = vshll.u32 920167782, %v1146
        %v1162 = vshrl.u32 1326507024, %v1147
        %v1163 = vor.u32 %v1161, %v1162
        %vm1164 = vcmp.lt.s32.totalorder %v1145, 1
        %vm1165 = vcmp.lt.s32.totalorder %v1145, 2
        %vm1166 = vcmp.lt.s32.totalorder %v1145, 3
        %vm1167 = vcmp.lt.s32.totalorder %v1145, 4
        %v1168 = vsel %vm1164, %v1148, %v1151
        %v1169 = vsel %vm1167, %v1157, 2102212464
        %v1170 = vsel %vm1166, %v1154, %v1169
        %v1171 = vsel %vm1165, %v1168, %v1170
        %v1172 = vsel %vm1164, %v1151, %v1154
        %v1173 = vsel %vm1167, %v1160, 920167782
        %v1174 = vsel %vm1166, %v1157, %v1173
        %v1175 = vsel %vm1165, %v1172, %v1174
        %v1176 = vsel %vm1164, %v1154, %v1157
        %v1177 = vsel %vm1167, %v1163, 1326507024
        %v1178 = vsel %vm1166, %v1160, %v1177
        %v1179 = vsel %vm1165, %v1176, %v1178
        %v1180 = vshll.u32 %v1140, 8
        %v1181 = vmul.u32.u64.compose %v1180, %v1179
        %v1182 = vextract.low.u32 %v1181
        %v1183 = vextract.high.u32 %v1181
        %v1184 = vmul.u32.u64.compose %v1180, %v1175
        %v1185 = vextract.low.u32 %v1184
        %v1186 = vextract.high.u32 %v1184
        %v1187 = vmul.u32 %v1180, %v1171
        %v1188 = vadd.s32 %v1183, %v1185
        %vm1189 = vc.u32 %v1183, %v1185
        %v1190 = vadd.s32 %v1186, 1
        %v1191 = vsel %vm1189, %v1190, %v1186
        %v1192 = vadd.s32 %v1187, %v1191
        %v1193 = vadd.s32 %v1192, 536870912
        %v1194 = vshrl.u32 %v1193, 30
        %v1195 = vshll.u32 %v1194, 30
        %v1196 = vsub.s32 %v1192, %v1195
        %vm1197 = vcmp.lt.s32.totalorder %v1196, 0
        %v1198 = vsub.s32 0, %v1196
        %v1199 = vsel %vm1197, %v1198, %v1196
        %v1200 = vclz %v1199
        %v1201 = vsub.s32 %v1200, 2
        %vm1202 = vcmp.gt.s32.totalorder 0, %v1201
        %v1203 = vsel %vm1202, 0, %v1201
        %v1204 = vsub.s32 32, %v1203
        %v1205 = vshll.u32 %v1196, %v1203
        %v1206 = vshrl.u32 %v1188, %v1204
        %v1207 = vor.u32 %v1205, %v1206
        %v1208 = vsub.s32 4294967266, %v1203
        %v1209 = vadd.s32 %v1208, 127
        %v1210 = vshll.u32 %v1209, 23
        %v1211 = vor.u32 4788187, %v1210
        %v1212 = vand.u32 2147483647, %v1211
        %v1214 = vcvt.s32.f32 %v1207
        %v1215 = vmul.f32 %v1214, %v1212
        %v1216 = vxor.u32 %v1215, 2147483648
        %v1217 = vsel %vm1134, %v1216, %v1215
        %v1218 = vsub.s32 4, %v1194
        %v1219 = vsel %vm1134, %v1218, %v1194
        %v1220 = vsel %vm1133, %v712, %v1217
        %v1221 = vsel %vm1133, 0, %v1219
        %v1222 = vcosq.f32.pop %v1220
        %v1223 = vsinq.f32.pop %v1220
        %vm1224 = vweird.f32 %v712
        %v1225 = vadd.s32 %v1221, 3
        %v1226 = vand.u32 %v1225, 3
        %vm1227 = vcmp.lt.s32.totalorder %v1226, 2
        %vm1228 = vcmp.eq.s32.totalorder %v1226, 0
        %v1229 = vxor.u32 %v1223, 2147483648
        %v1230 = vsel %vm1228, %v1222, %v1229
        %vm1231 = vcmp.eq.s32.totalorder %v1226, 2
        %v1232 = vxor.u32 %v1222, 2147483648
        %v1233 = vsel %vm1231, %v1232, %v1223
        %v1234 = vsel %vm1227, %v1230, %v1233
        %v1235 = vsel %vm1224, nan, %v1234
        %v1236 = vand.u32 2147483647, %v713
        %vm1237 = vcmp.le.f32.partialorder %v1236, 0.7853982
        %vm1238 = vcmp.lt.s32.totalorder %v713, 0
        %v1239 = vand.u32 %v713, 2139095040
        %v1240 = vshrl.u32 %v1239, 23
        %v1241 = vsub.s32 %v1240, 127
        %v1242 = vand.u32 2147483647, %v713
        %v1243 = vand.u32 %v1242, 8388607
        %v1244 = vor.u32 %v1243, 8388608
        %v1245 = vsub.s32 0, %v1244
        %v1246 = vadd.s32 %v1241, 1
        %vm1247 = vcmp.gt.s32.totalorder %v1246, 0
        %v1248 = vsel %vm1247, %v1246, 0
        %v1249 = vshrl.u32 %v1248, 5
        %v1250 = vand.u32 %v1248, 31
        %v1251 = vsub.s32 32, %v1250
        %v1252 = vshrl.u32 683565275, %v1251
        %v1253 = vshll.u32 683565275, %v1250
        %v1254 = vshrl.u32 2475754826, %v1251
        %v1255 = vor.u32 %v1253, %v1254
        %v1256 = vshll.u32 2475754826, %v1250
        %v1257 = vshrl.u32 2131351028, %v1251
        %v1258 = vor.u32 %v1256, %v1257
        %v1259 = vshll.u32 2131351028, %v1250
        %v1260 = vshrl.u32 2102212464, %v1251
        %v1261 = vor.u32 %v1259, %v1260
        %v1262 = vshll.u32 2102212464, %v1250
        %v1263 = vshrl.u32 920167782, %v1251
        %v1264 = vor.u32 %v1262, %v1263
        %v1265 = vshll.u32 920167782, %v1250
        %v1266 = vshrl.u32 1326507024, %v1251
        %v1267 = vor.u32 %v1265, %v1266
        %vm1268 = vcmp.lt.s32.totalorder %v1249, 1
        %vm1269 = vcmp.lt.s32.totalorder %v1249, 2
        %vm1270 = vcmp.lt.s32.totalorder %v1249, 3
        %vm1271 = vcmp.lt.s32.totalorder %v1249, 4
        %v1272 = vsel %vm1268, %v1252, %v1255
        %v1273 = vsel %vm1271, %v1261, 2102212464
        %v1274 = vsel %vm1270, %v1258, %v1273
        %v1275 = vsel %vm1269, %v1272, %v1274
        %v1276 = vsel %vm1268, %v1255, %v1258
        %v1277 = vsel %vm1271, %v1264, 920167782
        %v1278 = vsel %vm1270, %v1261, %v1277
        %v1279 = vsel %vm1269, %v1276, %v1278
        %v1280 = vsel %vm1268, %v1258, %v1261
        %v1281 = vsel %vm1271, %v1267, 1326507024
        %v1282 = vsel %vm1270, %v1264, %v1281
        %v1283 = vsel %vm1269, %v1280, %v1282
        %v1284 = vshll.u32 %v1244, 8
        %v1285 = vmul.u32.u64.compose %v1284, %v1283
        %v1286 = vextract.low.u32 %v1285
        %v1287 = vextract.high.u32 %v1285
        %v1288 = vmul.u32.u64.compose %v1284, %v1279
        %v1289 = vextract.low.u32 %v1288
        %v1290 = vextract.high.u32 %v1288
        %v1291 = vmul.u32 %v1284, %v1275
        %v1292 = vadd.s32 %v1287, %v1289
        %vm1293 = vc.u32 %v1287, %v1289
        %v1294 = vadd.s32 %v1290, 1
        %v1295 = vsel %vm1293, %v1294, %v1290
        %v1296 = vadd.s32 %v1291, %v1295
        %v1297 = vadd.s32 %v1296, 536870912
        %v1298 = vshrl.u32 %v1297, 30
        %v1299 = vshll.u32 %v1298, 30
        %v1300 = vsub.s32 %v1296, %v1299
        %vm1301 = vcmp.lt.s32.totalorder %v1300, 0
        %v1302 = vsub.s32 0, %v1300
        %v1303 = vsel %vm1301, %v1302, %v1300
        %v1304 = vclz %v1303
        %v1305 = vsub.s32 %v1304, 2
        %vm1306 = vcmp.gt.s32.totalorder 0, %v1305
        %v1307 = vsel %vm1306, 0, %v1305
        %v1308 = vsub.s32 32, %v1307
        %v1309 = vshll.u32 %v1300, %v1307
        %v1310 = vshrl.u32 %v1292, %v1308
        %v1311 = vor.u32 %v1309, %v1310
        %v1312 = vsub.s32 4294967266, %v1307
        %v1313 = vadd.s32 %v1312, 127
        %v1314 = vshll.u32 %v1313, 23
        %v1315 = vor.u32 4788187, %v1314
        %v1316 = vand.u32 2147483647, %v1315
        %v1318 = vcvt.s32.f32 %v1311
        %v1319 = vmul.f32 %v1318, %v1316
        %v1320 = vxor.u32 %v1319, 2147483648
        %v1321 = vsel %vm1238, %v1320, %v1319
        %v1322 = vsub.s32 4, %v1298
        %v1323 = vsel %vm1238, %v1322, %v1298
        %v1324 = vsel %vm1237, %v713, %v1321
        %v1325 = vsel %vm1237, 0, %v1323
        %v1326 = vcosq.f32.pop %v1324
        %v1327 = vsinq.f32.pop %v1324
        %vm1328 = vweird.f32 %v713
        %v1329 = vadd.s32 %v1325, 3
        %v1330 = vand.u32 %v1329, 3
        %vm1331 = vcmp.lt.s32.totalorder %v1330, 2
        %vm1332 = vcmp.eq.s32.totalorder %v1330, 0
        %v1333 = vxor.u32 %v1327, 2147483648
        %v1334 = vsel %vm1332, %v1326, %v1333
        %vm1335 = vcmp.eq.s32.totalorder %v1330, 2
        %v1336 = vxor.u32 %v1326, 2147483648
        %v1337 = vsel %vm1335, %v1336, %v1327
        %v1338 = vsel %vm1331, %v1334, %v1337
        %v1339 = vsel %vm1328, nan, %v1338
        %v1340 = vand.u32 2147483647, %v714
        %vm1341 = vcmp.le.f32.partialorder %v1340, 0.7853982
        %vm1342 = vcmp.lt.s32.totalorder %v714, 0
        %v1343 = vand.u32 %v714, 2139095040
        %v1344 = vshrl.u32 %v1343, 23
        %v1345 = vsub.s32 %v1344, 127
        %v1346 = vand.u32 2147483647, %v714
        %v1347 = vand.u32 %v1346, 8388607
        %v1348 = vor.u32 %v1347, 8388608
        %v1349 = vsub.s32 0, %v1348
        %v1350 = vadd.s32 %v1345, 1
        %vm1351 = vcmp.gt.s32.totalorder %v1350, 0
        %v1352 = vsel %vm1351, %v1350, 0
        %v1353 = vshrl.u32 %v1352, 5
        %v1354 = vand.u32 %v1352, 31
        %v1355 = vsub.s32 32, %v1354
        %v1356 = vshrl.u32 683565275, %v1355
        %v1357 = vshll.u32 683565275, %v1354
        %v1358 = vshrl.u32 2475754826, %v1355
        %v1359 = vor.u32 %v1357, %v1358
        %v1360 = vshll.u32 2475754826, %v1354
        %v1361 = vshrl.u32 2131351028, %v1355
        %v1362 = vor.u32 %v1360, %v1361
        %v1363 = vshll.u32 2131351028, %v1354
        %v1364 = vshrl.u32 2102212464, %v1355
        %v1365 = vor.u32 %v1363, %v1364
        %v1366 = vshll.u32 2102212464, %v1354
        %v1367 = vshrl.u32 920167782, %v1355
        %v1368 = vor.u32 %v1366, %v1367
        %v1369 = vshll.u32 920167782, %v1354
        %v1370 = vshrl.u32 1326507024, %v1355
        %v1371 = vor.u32 %v1369, %v1370
        %vm1372 = vcmp.lt.s32.totalorder %v1353, 1
        %vm1373 = vcmp.lt.s32.totalorder %v1353, 2
        %vm1374 = vcmp.lt.s32.totalorder %v1353, 3
        %vm1375 = vcmp.lt.s32.totalorder %v1353, 4
        %v1376 = vsel %vm1372, %v1356, %v1359
        %v1377 = vsel %vm1375, %v1365, 2102212464
        %v1378 = vsel %vm1374, %v1362, %v1377
        %v1379 = vsel %vm1373, %v1376, %v1378
        %v1380 = vsel %vm1372, %v1359, %v1362
        %v1381 = vsel %vm1375, %v1368, 920167782
        %v1382 = vsel %vm1374, %v1365, %v1381
        %v1383 = vsel %vm1373, %v1380, %v1382
        %v1384 = vsel %vm1372, %v1362, %v1365
        %v1385 = vsel %vm1375, %v1371, 1326507024
        %v1386 = vsel %vm1374, %v1368, %v1385
        %v1387 = vsel %vm1373, %v1384, %v1386
        %v1388 = vshll.u32 %v1348, 8
        %v1389 = vmul.u32.u64.compose %v1388, %v1387
        %v1390 = vextract.low.u32 %v1389
        %v1391 = vextract.high.u32 %v1389
        %v1392 = vmul.u32.u64.compose %v1388, %v1383
        %v1393 = vextract.low.u32 %v1392
        %v1394 = vextract.high.u32 %v1392
        %v1395 = vmul.u32 %v1388, %v1379
        %v1396 = vadd.s32 %v1391, %v1393
        %vm1397 = vc.u32 %v1391, %v1393
        %v1398 = vadd.s32 %v1394, 1
        %v1399 = vsel %vm1397, %v1398, %v1394
        %v1400 = vadd.s32 %v1395, %v1399
        %v1401 = vadd.s32 %v1400, 536870912
        %v1402 = vshrl.u32 %v1401, 30
        %v1403 = vshll.u32 %v1402, 30
        %v1404 = vsub.s32 %v1400, %v1403
        %vm1405 = vcmp.lt.s32.totalorder %v1404, 0
        %v1406 = vsub.s32 0, %v1404
        %v1407 = vsel %vm1405, %v1406, %v1404
        %v1408 = vclz %v1407
        %v1409 = vsub.s32 %v1408, 2
        %vm1410 = vcmp.gt.s32.totalorder 0, %v1409
        %v1411 = vsel %vm1410, 0, %v1409
        %v1412 = vsub.s32 32, %v1411
        %v1413 = vshll.u32 %v1404, %v1411
        %v1414 = vshrl.u32 %v1396, %v1412
        %v1415 = vor.u32 %v1413, %v1414
        %v1416 = vsub.s32 4294967266, %v1411
        %v1417 = vadd.s32 %v1416, 127
        %v1418 = vshll.u32 %v1417, 23
        %v1419 = vor.u32 4788187, %v1418
        %v1420 = vand.u32 2147483647, %v1419
        %v1422 = vcvt.s32.f32 %v1415
        %v1423 = vmul.f32 %v1422, %v1420
        %v1424 = vxor.u32 %v1423, 2147483648
        %v1425 = vsel %vm1342, %v1424, %v1423
        %v1426 = vsub.s32 4, %v1402
        %v1427 = vsel %vm1342, %v1426, %v1402
        %v1428 = vsel %vm1341, %v714, %v1425
        %v1429 = vsel %vm1341, 0, %v1427
        %v1430 = vcosq.f32.pop %v1428
        %v1431 = vsinq.f32.pop %v1428
        %vm1432 = vweird.f32 %v714
        %v1433 = vadd.s32 %v1429, 3
        %v1434 = vand.u32 %v1433, 3
        %vm1435 = vcmp.lt.s32.totalorder %v1434, 2
        %vm1436 = vcmp.eq.s32.totalorder %v1434, 0
        %v1437 = vxor.u32 %v1431, 2147483648
        %v1438 = vsel %vm1436, %v1430, %v1437
        %vm1439 = vcmp.eq.s32.totalorder %v1434, 2
        %v1440 = vxor.u32 %v1430, 2147483648
        %v1441 = vsel %vm1439, %v1440, %v1431
        %v1442 = vsel %vm1435, %v1438, %v1441
        %v1443 = vsel %vm1432, nan, %v1442
        %v1444 = vand.u32 2147483647, %v715
        %vm1445 = vcmp.le.f32.partialorder %v1444, 0.7853982
        %vm1446 = vcmp.lt.s32.totalorder %v715, 0
        %v1447 = vand.u32 %v715, 2139095040
        %v1448 = vshrl.u32 %v1447, 23
        %v1449 = vsub.s32 %v1448, 127
        %v1450 = vand.u32 2147483647, %v715
        %v1451 = vand.u32 %v1450, 8388607
        %v1452 = vor.u32 %v1451, 8388608
        %v1453 = vsub.s32 0, %v1452
        %v1454 = vadd.s32 %v1449, 1
        %vm1455 = vcmp.gt.s32.totalorder %v1454, 0
        %v1456 = vsel %vm1455, %v1454, 0
        %v1457 = vshrl.u32 %v1456, 5
        %v1458 = vand.u32 %v1456, 31
        %v1459 = vsub.s32 32, %v1458
        %v1460 = vshrl.u32 683565275, %v1459
        %v1461 = vshll.u32 683565275, %v1458
        %v1462 = vshrl.u32 2475754826, %v1459
        %v1463 = vor.u32 %v1461, %v1462
        %v1464 = vshll.u32 2475754826, %v1458
        %v1465 = vshrl.u32 2131351028, %v1459
        %v1466 = vor.u32 %v1464, %v1465
        %v1467 = vshll.u32 2131351028, %v1458
        %v1468 = vshrl.u32 2102212464, %v1459
        %v1469 = vor.u32 %v1467, %v1468
        %v1470 = vshll.u32 2102212464, %v1458
        %v1471 = vshrl.u32 920167782, %v1459
        %v1472 = vor.u32 %v1470, %v1471
        %v1473 = vshll.u32 920167782, %v1458
        %v1474 = vshrl.u32 1326507024, %v1459
        %v1475 = vor.u32 %v1473, %v1474
        %vm1476 = vcmp.lt.s32.totalorder %v1457, 1
        %vm1477 = vcmp.lt.s32.totalorder %v1457, 2
        %vm1478 = vcmp.lt.s32.totalorder %v1457, 3
        %vm1479 = vcmp.lt.s32.totalorder %v1457, 4
        %v1480 = vsel %vm1476, %v1460, %v1463
        %v1481 = vsel %vm1479, %v1469, 2102212464
        %v1482 = vsel %vm1478, %v1466, %v1481
        %v1483 = vsel %vm1477, %v1480, %v1482
        %v1484 = vsel %vm1476, %v1463, %v1466
        %v1485 = vsel %vm1479, %v1472, 920167782
        %v1486 = vsel %vm1478, %v1469, %v1485
        %v1487 = vsel %vm1477, %v1484, %v1486
        %v1488 = vsel %vm1476, %v1466, %v1469
        %v1489 = vsel %vm1479, %v1475, 1326507024
        %v1490 = vsel %vm1478, %v1472, %v1489
        %v1491 = vsel %vm1477, %v1488, %v1490
        %v1492 = vshll.u32 %v1452, 8
        %v1493 = vmul.u32.u64.compose %v1492, %v1491
        %v1494 = vextract.low.u32 %v1493
        %v1495 = vextract.high.u32 %v1493
        %v1496 = vmul.u32.u64.compose %v1492, %v1487
        %v1497 = vextract.low.u32 %v1496
        %v1498 = vextract.high.u32 %v1496
        %v1499 = vmul.u32 %v1492, %v1483
        %v1500 = vadd.s32 %v1495, %v1497
        %vm1501 = vc.u32 %v1495, %v1497
        %v1502 = vadd.s32 %v1498, 1
        %v1503 = vsel %vm1501, %v1502, %v1498
        %v1504 = vadd.s32 %v1499, %v1503
        %v1505 = vadd.s32 %v1504, 536870912
        %v1506 = vshrl.u32 %v1505, 30
        %v1507 = vshll.u32 %v1506, 30
        %v1508 = vsub.s32 %v1504, %v1507
        %vm1509 = vcmp.lt.s32.totalorder %v1508, 0
        %v1510 = vsub.s32 0, %v1508
        %v1511 = vsel %vm1509, %v1510, %v1508
        %v1512 = vclz %v1511
        %v1513 = vsub.s32 %v1512, 2
        %vm1514 = vcmp.gt.s32.totalorder 0, %v1513
        %v1515 = vsel %vm1514, 0, %v1513
        %v1516 = vsub.s32 32, %v1515
        %v1517 = vshll.u32 %v1508, %v1515
        %v1518 = vshrl.u32 %v1500, %v1516
        %v1519 = vor.u32 %v1517, %v1518
        %v1520 = vsub.s32 4294967266, %v1515
        %v1521 = vadd.s32 %v1520, 127
        %v1522 = vshll.u32 %v1521, 23
        %v1523 = vor.u32 4788187, %v1522
        %v1524 = vand.u32 2147483647, %v1523
        %v1526 = vcvt.s32.f32 %v1519
        %v1527 = vmul.f32 %v1526, %v1524
        %v1528 = vxor.u32 %v1527, 2147483648
        %v1529 = vsel %vm1446, %v1528, %v1527
        %v1530 = vsub.s32 4, %v1506
        %v1531 = vsel %vm1446, %v1530, %v1506
        %v1532 = vsel %vm1445, %v715, %v1529
        %v1533 = vsel %vm1445, 0, %v1531
        %v1534 = vcosq.f32.pop %v1532
        %v1535 = vsinq.f32.pop %v1532
        %vm1536 = vweird.f32 %v715
        %v1537 = vadd.s32 %v1533, 3
        %v1538 = vand.u32 %v1537, 3
        %vm1539 = vcmp.lt.s32.totalorder %v1538, 2
        %vm1540 = vcmp.eq.s32.totalorder %v1538, 0
        %v1541 = vxor.u32 %v1535, 2147483648
        %v1542 = vsel %vm1540, %v1534, %v1541
        %vm1543 = vcmp.eq.s32.totalorder %v1538, 2
        %v1544 = vxor.u32 %v1534, 2147483648
        %v1545 = vsel %vm1543, %v1544, %v1535
        %v1546 = vsel %vm1539, %v1542, %v1545
        %v1547 = vsel %vm1536, nan, %v1546
        %v1549 = vlaneseq
        %v1550 = vshrl.u32 %v1549, 7
        %v1551 = vsub.s32 0, %v1550
        %v1552 = vrot.slane %v658, %v1551
        %v1553 = vlaneseq
        %v1554 = vshrl.u32 %v1553, 7
        %v1555 = vsub.s32 1, %v1554
        %v1556 = vrot.slane %v658, %v1555
        %v1557 = vlaneseq
        %v1558 = vshrl.u32 %v1557, 7
        %v1559 = vsub.s32 2, %v1558
        %v1560 = vrot.slane %v658, %v1559
        %v1561 = vlaneseq
        %v1562 = vshrl.u32 %v1561, 7
        %v1563 = vsub.s32 3, %v1562
        %v1564 = vrot.slane %v658, %v1563
        %v1565 = vlaneseq
        %v1566 = vshrl.u32 %v1565, 7
        %v1567 = vsub.s32 4, %v1566
        %v1568 = vrot.slane %v658, %v1567
        %v1569 = vlaneseq
        %v1570 = vshrl.u32 %v1569, 7
        %v1571 = vsub.s32 5, %v1570
        %v1572 = vrot.slane %v658, %v1571
        %v1573 = vlaneseq
        %v1574 = vshrl.u32 %v1573, 7
        %v1575 = vsub.s32 6, %v1574
        %v1576 = vrot.slane %v658, %v1575
        %v1577 = vlaneseq
        %v1578 = vshrl.u32 %v1577, 7
        %v1579 = vsub.s32 7, %v1578
        %v1580 = vrot.slane %v658, %v1579
        %v1589 = vsub.f32 %v819, %v1552
        %v1590 = vsub.f32 %v923, %v1556
        %v1591 = vsub.f32 %v1027, %v1560
        %v1592 = vsub.f32 %v1131, %v1564
        %v1593 = vsub.f32 %v1235, %v1568
        %v1594 = vsub.f32 %v1339, %v1572
        %v1595 = vsub.f32 %v1443, %v1576
        %v1596 = vsub.f32 %v1547, %v1580
        %v1597 = vmul.f32 %v1589, 0.5
        %v1598 = vmul.f32 %v1590, 0.5
        %v1599 = vmul.f32 %v1591, 0.5
        %v1600 = vmul.f32 %v1592, 0.5
        %v1601 = vmul.f32 %v1593, 0.5
        %v1602 = vmul.f32 %v1594, 0.5
        %v1603 = vmul.f32 %v1595, 0.5
        %v1604 = vmul.f32 %v1596, 0.5
        %v1605 = vld [vmem:[#allocation2] sm:$0xff]
        %v1606 = vmul.f32 %v1597, %v1597
        %v1607 = vmul.f32 %v1598, %v1598
        %v1608 = vmul.f32 %v1599, %v1599
        %v1609 = vmul.f32 %v1600, %v1600
        %v1610 = vmul.f32 %v1601, %v1601
        %v1611 = vmul.f32 %v1602, %v1602
        %v1612 = vmul.f32 %v1603, %v1603
        %v1613 = vmul.f32 %v1604, %v1604
        %v1614 = vadd.f32 %v1606, %v1607
        %v1615 = vadd.f32 %v1614, %v1608
        %v1616 = vadd.f32 %v1615, %v1609
        %v1617 = vadd.f32 %v1616, %v1610
        %v1618 = vadd.f32 %v1617, %v1611
        %v1619 = vadd.f32 %v1618, %v1612
        %v1620 = vadd.f32 %v1619, %v1613
        %1621 = vadd.xlane.f32.xlu0 %v1620
        %v1622 = vpop.xlane.xlu0 %1621
        %v1623 = vadd.f32 %v1605, %v1622
        %vm1624 = vcmask 7168
        %1625 = vst.msk [vmem:[#allocation2] sm:$0xff] %vm1624, %v1623
        %v1626 = vld [vmem:[%s320] sm:$0xff]
        %v1627 = vpack.c.bf16 %v1597, %v1597
        %v1628 = vpack.c.bf16 %v1598, %v1598
        %v1629 = vpack.c.bf16 %v1599, %v1599
        %v1630 = vpack.c.bf16 %v1600, %v1600
        %v1631 = vpack.c.bf16 %v1601, %v1601
        %v1632 = vpack.c.bf16 %v1602, %v1602
        %v1633 = vpack.c.bf16 %v1603, %v1603
        %v1634 = vpack.c.bf16 %v1604, %v1604
        %s1635 = sshra.s32 %s329, 3
        %s1636 = sand.u32 %s329, 7
        %s1637 = smul.addr %s1635, 4
        %s1638 = scalar_lea.vmem [#allocation9], %s1637
        %v1639 = vld [vmem:[%s1638] sm:$0xf]
        %v1640 = vld [vmem:[%s1638 + $0x4] sm:$0xf]
        %v1641 = vld [vmem:[%s1638 + $0x8] sm:$0xf]
        %v1642 = vld [vmem:[%s1638 + $0xc] sm:$0xf]
        %v1643 = vld [vmem:[%s1638 + $0x10] sm:$0xf]
        %v1644 = vld [vmem:[%s1638 + $0x14] sm:$0xf]
        %v1645 = vld [vmem:[%s1638 + $0x18] sm:$0xf]
        %v1646 = vld [vmem:[%s1638 + $0x1c] sm:$0xf]
        %v1647 = vld [vmem:[%s1638 + $0x20] sm:$0xf]
        %v1648 = vld [vmem:[%s1638 + $0x24] sm:$0xf]
        %v1649 = vld [vmem:[%s1638 + $0x28] sm:$0xf]
        %v1650 = vld [vmem:[%s1638 + $0x2c] sm:$0xf]
        %v1651 = vld [vmem:[%s1638 + $0x30] sm:$0xf]
        %v1652 = vld [vmem:[%s1638 + $0x34] sm:$0xf]
        %v1653 = vld [vmem:[%s1638 + $0x38] sm:$0xf]
        %v1654 = vld [vmem:[%s1638 + $0x3c] sm:$0xf]
        %v1655 = vld [vmem:[%s1638 + $0x40] sm:$0xf]
        %v1656 = vld [vmem:[%s1638 + $0x44] sm:$0xf]
        %v1657 = vld [vmem:[%s1638 + $0x48] sm:$0xf]
        %v1658 = vld [vmem:[%s1638 + $0x4c] sm:$0xf]
        %v1659 = vld [vmem:[%s1638 + $0x50] sm:$0xf]
        %v1660 = vld [vmem:[%s1638 + $0x54] sm:$0xf]
        %v1661 = vld [vmem:[%s1638 + $0x58] sm:$0xf]
        %v1662 = vld [vmem:[%s1638 + $0x5c] sm:$0xf]
        %v1663 = vld [vmem:[%s1638 + $0x60] sm:$0xf]
        %v1664 = vld [vmem:[%s1638 + $0x64] sm:$0xf]
        %v1665 = vld [vmem:[%s1638 + $0x68] sm:$0xf]
        %v1666 = vld [vmem:[%s1638 + $0x6c] sm:$0xf]
        %v1667 = vld [vmem:[%s1638 + $0x70] sm:$0xf]
        %v1668 = vld [vmem:[%s1638 + $0x74] sm:$0xf]
        %v1669 = vld [vmem:[%s1638 + $0x78] sm:$0xf]
        %v1670 = vld [vmem:[%s1638 + $0x7c] sm:$0xf]
        %v1671 = vld [vmem:[%s1638 + $0x80] sm:$0xf]
        %v1672 = vld [vmem:[%s1638 + $0x84] sm:$0xf]
        %v1673 = vld [vmem:[%s1638 + $0x88] sm:$0xf]
        %v1674 = vld [vmem:[%s1638 + $0x8c] sm:$0xf]
        %v1675 = vld [vmem:[%s1638 + $0x90] sm:$0xf]
        %v1676 = vld [vmem:[%s1638 + $0x94] sm:$0xf]
        %v1677 = vld [vmem:[%s1638 + $0x98] sm:$0xf]
        %v1678 = vld [vmem:[%s1638 + $0x9c] sm:$0xf]
        %v1679 = vld [vmem:[%s1638 + $0xa0] sm:$0xf]
        %v1680 = vld [vmem:[%s1638 + $0xa4] sm:$0xf]
        %v1681 = vld [vmem:[%s1638 + $0xa8] sm:$0xf]
        %v1682 = vld [vmem:[%s1638 + $0xac] sm:$0xf]
        %v1683 = vld [vmem:[%s1638 + $0xb0] sm:$0xf]
        %v1684 = vld [vmem:[%s1638 + $0xb4] sm:$0xf]
        %v1685 = vld [vmem:[%s1638 + $0xb8] sm:$0xf]
        %v1686 = vld [vmem:[%s1638 + $0xbc] sm:$0xf]
        %v1687 = vld [vmem:[%s1638 + $0xc0] sm:$0xf]
        %v1688 = vld [vmem:[%s1638 + $0xc4] sm:$0xf]
        %v1689 = vld [vmem:[%s1638 + $0xc8] sm:$0xf]
        %v1690 = vld [vmem:[%s1638 + $0xcc] sm:$0xf]
        %v1691 = vld [vmem:[%s1638 + $0xd0] sm:$0xf]
        %v1692 = vld [vmem:[%s1638 + $0xd4] sm:$0xf]
        %v1693 = vld [vmem:[%s1638 + $0xd8] sm:$0xf]
        %v1694 = vld [vmem:[%s1638 + $0xdc] sm:$0xf]
        %v1695 = vld [vmem:[%s1638 + $0xe0] sm:$0xf]
        %v1696 = vld [vmem:[%s1638 + $0xe4] sm:$0xf]
        %v1697 = vld [vmem:[%s1638 + $0xe8] sm:$0xf]
        %v1698 = vld [vmem:[%s1638 + $0xec] sm:$0xf]
        %v1699 = vld [vmem:[%s1638 + $0xf0] sm:$0xf]
        %v1700 = vld [vmem:[%s1638 + $0xf4] sm:$0xf]
        %v1701 = vld [vmem:[%s1638 + $0xf8] sm:$0xf]
        %v1702 = vld [vmem:[%s1638 + $0xfc] sm:$0xf]
        %v1703 = vld [vmem:[%s1638 + $0x100] sm:$0xf]
        %v1704 = vld [vmem:[%s1638 + $0x104] sm:$0xf]
        %v1705 = vld [vmem:[%s1638 + $0x108] sm:$0xf]
        %v1706 = vld [vmem:[%s1638 + $0x10c] sm:$0xf]
        %v1707 = vld [vmem:[%s1638 + $0x110] sm:$0xf]
        %v1708 = vld [vmem:[%s1638 + $0x114] sm:$0xf]
        %v1709 = vld [vmem:[%s1638 + $0x118] sm:$0xf]
        %v1710 = vld [vmem:[%s1638 + $0x11c] sm:$0xf]
        %v1711 = vld [vmem:[%s1638 + $0x120] sm:$0xf]
        %v1712 = vld [vmem:[%s1638 + $0x124] sm:$0xf]
        %v1713 = vld [vmem:[%s1638 + $0x128] sm:$0xf]
        %v1714 = vld [vmem:[%s1638 + $0x12c] sm:$0xf]
        %v1715 = vld [vmem:[%s1638 + $0x130] sm:$0xf]
        %v1716 = vld [vmem:[%s1638 + $0x134] sm:$0xf]
        %v1717 = vld [vmem:[%s1638 + $0x138] sm:$0xf]
        %v1718 = vld [vmem:[%s1638 + $0x13c] sm:$0xf]
        %v1719 = vld [vmem:[%s1638 + $0x140] sm:$0xf]
        %v1720 = vld [vmem:[%s1638 + $0x144] sm:$0xf]
        %v1721 = vld [vmem:[%s1638 + $0x148] sm:$0xf]
        %v1722 = vld [vmem:[%s1638 + $0x14c] sm:$0xf]
        %v1723 = vld [vmem:[%s1638 + $0x150] sm:$0xf]
        %v1724 = vld [vmem:[%s1638 + $0x154] sm:$0xf]
        %v1725 = vld [vmem:[%s1638 + $0x158] sm:$0xf]
        %v1726 = vld [vmem:[%s1638 + $0x15c] sm:$0xf]
        %v1727 = vld [vmem:[%s1638 + $0x160] sm:$0xf]
        %v1728 = vld [vmem:[%s1638 + $0x164] sm:$0xf]
        %v1729 = vld [vmem:[%s1638 + $0x168] sm:$0xf]
        %v1730 = vld [vmem:[%s1638 + $0x16c] sm:$0xf]
        %v1731 = vld [vmem:[%s1638 + $0x170] sm:$0xf]
        %v1732 = vld [vmem:[%s1638 + $0x174] sm:$0xf]
        %v1733 = vld [vmem:[%s1638 + $0x178] sm:$0xf]
        %v1734 = vld [vmem:[%s1638 + $0x17c] sm:$0xf]
        %v1735 = vld [vmem:[%s1638 + $0x180] sm:$0xf]
        %v1736 = vld [vmem:[%s1638 + $0x184] sm:$0xf]
        %v1737 = vld [vmem:[%s1638 + $0x188] sm:$0xf]
        %v1738 = vld [vmem:[%s1638 + $0x18c] sm:$0xf]
        %v1739 = vld [vmem:[%s1638 + $0x190] sm:$0xf]
        %v1740 = vld [vmem:[%s1638 + $0x194] sm:$0xf]
        %v1741 = vld [vmem:[%s1638 + $0x198] sm:$0xf]
        %v1742 = vld [vmem:[%s1638 + $0x19c] sm:$0xf]
        %v1743 = vld [vmem:[%s1638 + $0x1a0] sm:$0xf]
        %v1744 = vld [vmem:[%s1638 + $0x1a4] sm:$0xf]
        %v1745 = vld [vmem:[%s1638 + $0x1a8] sm:$0xf]
        %v1746 = vld [vmem:[%s1638 + $0x1ac] sm:$0xf]
        %v1747 = vld [vmem:[%s1638 + $0x1b0] sm:$0xf]
        %v1748 = vld [vmem:[%s1638 + $0x1b4] sm:$0xf]
        %v1749 = vld [vmem:[%s1638 + $0x1b8] sm:$0xf]
        %v1750 = vld [vmem:[%s1638 + $0x1bc] sm:$0xf]
        %v1751 = vld [vmem:[%s1638 + $0x1c0] sm:$0xf]
        %v1752 = vld [vmem:[%s1638 + $0x1c4] sm:$0xf]
        %v1753 = vld [vmem:[%s1638 + $0x1c8] sm:$0xf]
        %v1754 = vld [vmem:[%s1638 + $0x1cc] sm:$0xf]
        %v1755 = vld [vmem:[%s1638 + $0x1d0] sm:$0xf]
        %v1756 = vld [vmem:[%s1638 + $0x1d4] sm:$0xf]
        %v1757 = vld [vmem:[%s1638 + $0x1d8] sm:$0xf]
        %v1758 = vld [vmem:[%s1638 + $0x1dc] sm:$0xf]
        %v1759 = vld [vmem:[%s1638 + $0x1e0] sm:$0xf]
        %v1760 = vld [vmem:[%s1638 + $0x1e4] sm:$0xf]
        %v1761 = vld [vmem:[%s1638 + $0x1e8] sm:$0xf]
        %v1762 = vld [vmem:[%s1638 + $0x1ec] sm:$0xf]
        %v1763 = vld [vmem:[%s1638 + $0x1f0] sm:$0xf]
        %v1764 = vld [vmem:[%s1638 + $0x1f4] sm:$0xf]
        %v1765 = vld [vmem:[%s1638 + $0x1f8] sm:$0xf]
        %v1766 = vld [vmem:[%s1638 + $0x1fc] sm:$0xf]
        %v1895 = vunpack.c.l.b16 %v1639
        %v1896 = vunpack.c.l.b16 %v1640
        %v1897 = vunpack.c.l.b16 %v1641
        %v1898 = vunpack.c.l.b16 %v1642
        %v1899 = vunpack.c.l.b16 %v1643
        %v1900 = vunpack.c.l.b16 %v1644
        %v1901 = vunpack.c.l.b16 %v1645
        %v1902 = vunpack.c.l.b16 %v1646
        %v1903 = vunpack.c.l.b16 %v1647
        %v1904 = vunpack.c.l.b16 %v1648
        %v1905 = vunpack.c.l.b16 %v1649
        %v1906 = vunpack.c.l.b16 %v1650
        %v1907 = vunpack.c.l.b16 %v1651
        %v1908 = vunpack.c.l.b16 %v1652
        %v1909 = vunpack.c.l.b16 %v1653
        %v1910 = vunpack.c.l.b16 %v1654
        %v1911 = vunpack.c.l.b16 %v1655
        %v1912 = vunpack.c.l.b16 %v1656
        %v1913 = vunpack.c.l.b16 %v1657
        %v1914 = vunpack.c.l.b16 %v1658
        %v1915 = vunpack.c.l.b16 %v1659
        %v1916 = vunpack.c.l.b16 %v1660
        %v1917 = vunpack.c.l.b16 %v1661
        %v1918 = vunpack.c.l.b16 %v1662
        %v1919 = vunpack.c.l.b16 %v1663
        %v1920 = vunpack.c.l.b16 %v1664
        %v1921 = vunpack.c.l.b16 %v1665
        %v1922 = vunpack.c.l.b16 %v1666
        %v1923 = vunpack.c.l.b16 %v1667
        %v1924 = vunpack.c.l.b16 %v1668
        %v1925 = vunpack.c.l.b16 %v1669
        %v1926 = vunpack.c.l.b16 %v1670
        %v1927 = vunpack.c.l.b16 %v1671
        %v1928 = vunpack.c.l.b16 %v1672
        %v1929 = vunpack.c.l.b16 %v1673
        %v1930 = vunpack.c.l.b16 %v1674
        %v1931 = vunpack.c.l.b16 %v1675
        %v1932 = vunpack.c.l.b16 %v1676
        %v1933 = vunpack.c.l.b16 %v1677
        %v1934 = vunpack.c.l.b16 %v1678
        %v1935 = vunpack.c.l.b16 %v1679
        %v1936 = vunpack.c.l.b16 %v1680
        %v1937 = vunpack.c.l.b16 %v1681
        %v1938 = vunpack.c.l.b16 %v1682
        %v1939 = vunpack.c.l.b16 %v1683
        %v1940 = vunpack.c.l.b16 %v1684
        %v1941 = vunpack.c.l.b16 %v1685
        %v1942 = vunpack.c.l.b16 %v1686
        %v1943 = vunpack.c.l.b16 %v1687
        %v1944 = vunpack.c.l.b16 %v1688
        %v1945 = vunpack.c.l.b16 %v1689
        %v1946 = vunpack.c.l.b16 %v1690
        %v1947 = vunpack.c.l.b16 %v1691
        %v1948 = vunpack.c.l.b16 %v1692
        %v1949 = vunpack.c.l.b16 %v1693
        %v1950 = vunpack.c.l.b16 %v1694
        %v1951 = vunpack.c.l.b16 %v1695
        %v1952 = vunpack.c.l.b16 %v1696
        %v1953 = vunpack.c.l.b16 %v1697
        %v1954 = vunpack.c.l.b16 %v1698
        %v1955 = vunpack.c.l.b16 %v1699
        %v1956 = vunpack.c.l.b16 %v1700
        %v1957 = vunpack.c.l.b16 %v1701
        %v1958 = vunpack.c.l.b16 %v1702
        %v1959 = vunpack.c.l.b16 %v1703
        %v1960 = vunpack.c.l.b16 %v1704
        %v1961 = vunpack.c.l.b16 %v1705
        %v1962 = vunpack.c.l.b16 %v1706
        %v1963 = vunpack.c.l.b16 %v1707
        %v1964 = vunpack.c.l.b16 %v1708
        %v1965 = vunpack.c.l.b16 %v1709
        %v1966 = vunpack.c.l.b16 %v1710
        %v1967 = vunpack.c.l.b16 %v1711
        %v1968 = vunpack.c.l.b16 %v1712
        %v1969 = vunpack.c.l.b16 %v1713
        %v1970 = vunpack.c.l.b16 %v1714
        %v1971 = vunpack.c.l.b16 %v1715
        %v1972 = vunpack.c.l.b16 %v1716
        %v1973 = vunpack.c.l.b16 %v1717
        %v1974 = vunpack.c.l.b16 %v1718
        %v1975 = vunpack.c.l.b16 %v1719
        %v1976 = vunpack.c.l.b16 %v1720
        %v1977 = vunpack.c.l.b16 %v1721
        %v1978 = vunpack.c.l.b16 %v1722
        %v1979 = vunpack.c.l.b16 %v1723
        %v1980 = vunpack.c.l.b16 %v1724
        %v1981 = vunpack.c.l.b16 %v1725
        %v1982 = vunpack.c.l.b16 %v1726
        %v1983 = vunpack.c.l.b16 %v1727
        %v1984 = vunpack.c.l.b16 %v1728
        %v1985 = vunpack.c.l.b16 %v1729
        %v1986 = vunpack.c.l.b16 %v1730
        %v1987 = vunpack.c.l.b16 %v1731
        %v1988 = vunpack.c.l.b16 %v1732
        %v1989 = vunpack.c.l.b16 %v1733
        %v1990 = vunpack.c.l.b16 %v1734
        %v1991 = vunpack.c.l.b16 %v1735
        %v1992 = vunpack.c.l.b16 %v1736
        %v1993 = vunpack.c.l.b16 %v1737
        %v1994 = vunpack.c.l.b16 %v1738
        %v1995 = vunpack.c.l.b16 %v1739
        %v1996 = vunpack.c.l.b16 %v1740
        %v1997 = vunpack.c.l.b16 %v1741
        %v1998 = vunpack.c.l.b16 %v1742
        %v1999 = vunpack.c.l.b16 %v1743
        %v2000 = vunpack.c.l.b16 %v1744
        %v2001 = vunpack.c.l.b16 %v1745
        %v2002 = vunpack.c.l.b16 %v1746
        %v2003 = vunpack.c.l.b16 %v1747
        %v2004 = vunpack.c.l.b16 %v1748
        %v2005 = vunpack.c.l.b16 %v1749
        %v2006 = vunpack.c.l.b16 %v1750
        %v2007 = vunpack.c.l.b16 %v1751
        %v2008 = vunpack.c.l.b16 %v1752
        %v2009 = vunpack.c.l.b16 %v1753
        %v2010 = vunpack.c.l.b16 %v1754
        %v2011 = vunpack.c.l.b16 %v1755
        %v2012 = vunpack.c.l.b16 %v1756
        %v2013 = vunpack.c.l.b16 %v1757
        %v2014 = vunpack.c.l.b16 %v1758
        %v2015 = vunpack.c.l.b16 %v1759
        %v2016 = vunpack.c.l.b16 %v1760
        %v2017 = vunpack.c.l.b16 %v1761
        %v2018 = vunpack.c.l.b16 %v1762
        %v2019 = vunpack.c.l.b16 %v1763
        %v2020 = vunpack.c.l.b16 %v1764
        %v2021 = vunpack.c.l.b16 %v1765
        %v2022 = vunpack.c.l.b16 %v1766
        %v2023 = vpack.c.b16 %v1896, %v1895
        %v2024 = vpack.c.b16 %v1898, %v1897
        %v2025 = vpack.c.b16 %v1900, %v1899
        %v2026 = vpack.c.b16 %v1902, %v1901
        %v2027 = vpack.c.b16 %v1904, %v1903
        %v2028 = vpack.c.b16 %v1906, %v1905
        %v2029 = vpack.c.b16 %v1908, %v1907
        %v2030 = vpack.c.b16 %v1910, %v1909
        %v2031 = vpack.c.b16 %v1912, %v1911
        %v2032 = vpack.c.b16 %v1914, %v1913
        %v2033 = vpack.c.b16 %v1916, %v1915
        %v2034 = vpack.c.b16 %v1918, %v1917
        %v2035 = vpack.c.b16 %v1920, %v1919
        %v2036 = vpack.c.b16 %v1922, %v1921
        %v2037 = vpack.c.b16 %v1924, %v1923
        %v2038 = vpack.c.b16 %v1926, %v1925
        %v2039 = vpack.c.b16 %v1928, %v1927
        %v2040 = vpack.c.b16 %v1930, %v1929
        %v2041 = vpack.c.b16 %v1932, %v1931
        %v2042 = vpack.c.b16 %v1934, %v1933
        %v2043 = vpack.c.b16 %v1936, %v1935
        %v2044 = vpack.c.b16 %v1938, %v1937
        %v2045 = vpack.c.b16 %v1940, %v1939
        %v2046 = vpack.c.b16 %v1942, %v1941
        %v2047 = vpack.c.b16 %v1944, %v1943
        %v2048 = vpack.c.b16 %v1946, %v1945
        %v2049 = vpack.c.b16 %v1948, %v1947
        %v2050 = vpack.c.b16 %v1950, %v1949
        %v2051 = vpack.c.b16 %v1952, %v1951
        %v2052 = vpack.c.b16 %v1954, %v1953
        %v2053 = vpack.c.b16 %v1956, %v1955
        %v2054 = vpack.c.b16 %v1958, %v1957
        %v2055 = vpack.c.b16 %v1960, %v1959
        %v2056 = vpack.c.b16 %v1962, %v1961
        %v2057 = vpack.c.b16 %v1964, %v1963
        %v2058 = vpack.c.b16 %v1966, %v1965
        %v2059 = vpack.c.b16 %v1968, %v1967
        %v2060 = vpack.c.b16 %v1970, %v1969
        %v2061 = vpack.c.b16 %v1972, %v1971
        %v2062 = vpack.c.b16 %v1974, %v1973
        %v2063 = vpack.c.b16 %v1976, %v1975
        %v2064 = vpack.c.b16 %v1978, %v1977
        %v2065 = vpack.c.b16 %v1980, %v1979
        %v2066 = vpack.c.b16 %v1982, %v1981
        %v2067 = vpack.c.b16 %v1984, %v1983
        %v2068 = vpack.c.b16 %v1986, %v1985
        %v2069 = vpack.c.b16 %v1988, %v1987
        %v2070 = vpack.c.b16 %v1990, %v1989
        %v2071 = vpack.c.b16 %v1992, %v1991
        %v2072 = vpack.c.b16 %v1994, %v1993
        %v2073 = vpack.c.b16 %v1996, %v1995
        %v2074 = vpack.c.b16 %v1998, %v1997
        %v2075 = vpack.c.b16 %v2000, %v1999
        %v2076 = vpack.c.b16 %v2002, %v2001
        %v2077 = vpack.c.b16 %v2004, %v2003
        %v2078 = vpack.c.b16 %v2006, %v2005
        %v2079 = vpack.c.b16 %v2008, %v2007
        %v2080 = vpack.c.b16 %v2010, %v2009
        %v2081 = vpack.c.b16 %v2012, %v2011
        %v2082 = vpack.c.b16 %v2014, %v2013
        %v2083 = vpack.c.b16 %v2016, %v2015
        %v2084 = vpack.c.b16 %v2018, %v2017
        %v2085 = vpack.c.b16 %v2020, %v2019
        %v2086 = vpack.c.b16 %v2022, %v2021
        %2151 = vmatprep.subr.bf16.mxu0 0
        %2152 = vmatpush1.bf16.msra.mxu0 %v2023
        %2153 = vmatprep.subr.bf16.mxu0 0
        %2154 = vmatpush1.bf16.msra.mxu0 %v2024
        %2155 = vmatprep.subr.bf16.mxu0 0
        %2156 = vmatpush1.bf16.msra.mxu0 %v2025
        %2157 = vmatprep.subr.bf16.mxu0 0
        %2158 = vmatpush1.bf16.msra.mxu0 %v2026
        %2159 = vmatprep.subr.bf16.mxu0 0
        %2160 = vmatpush1.bf16.msra.mxu0 %v2027
        %2161 = vmatprep.subr.bf16.mxu0 0
        %2162 = vmatpush1.bf16.msra.mxu0 %v2028
        %2163 = vmatprep.subr.bf16.mxu0 0
        %2164 = vmatpush1.bf16.msra.mxu0 %v2029
        %2165 = vmatprep.subr.bf16.mxu0 0
        %2166 = vmatpush1.bf16.msra.mxu0 %v2030
        %2167 = vmatprep.subr.bf16.mxu0 0
        %2168 = vmatpush1.bf16.msra.mxu0 %v2031
        %2169 = vmatprep.subr.bf16.mxu0 0
        %2170 = vmatpush1.bf16.msra.mxu0 %v2032
        %2171 = vmatprep.subr.bf16.mxu0 0
        %2172 = vmatpush1.bf16.msra.mxu0 %v2033
        %2173 = vmatprep.subr.bf16.mxu0 0
        %2174 = vmatpush1.bf16.msra.mxu0 %v2034
        %2175 = vmatprep.subr.bf16.mxu0 0
        %2176 = vmatpush1.bf16.msra.mxu0 %v2035
        %2177 = vmatprep.subr.bf16.mxu0 0
        %2178 = vmatpush1.bf16.msra.mxu0 %v2036
        %2179 = vmatprep.subr.bf16.mxu0 0
        %2180 = vmatpush1.bf16.msra.mxu0 %v2037
        %2181 = vmatprep.subr.bf16.mxu0 0
        %2182 = vmatpush1.bf16.msra.mxu0 %v2038
        %2183 = vmatprep.mubr.bf16.mxu0 %v1628
        %2184 = vmatmul.mubr.bf16.gmra.mrb[0].mxu0 %v1627
        %v2185 = vpop.f32.mrb[0].mxu0
        %v2186 = vadd.f32 0.0, %v2185
        %v2187 = vpop.f32.mrb[0].mxu0
        %v2188 = vpop.f32.mrb[0].mxu0
        %v2189 = vpop.f32.mrb[0].mxu0
        %2190 = vdwg.mxu0
        %2191 = vmatprep.subr.bf16.mxu0 0
        %2192 = vmatpush1.bf16.msra.mxu0 %v2039
        %2193 = vmatprep.subr.bf16.mxu0 0
        %2194 = vmatpush1.bf16.msra.mxu0 %v2040
        %2195 = vmatprep.subr.bf16.mxu0 0
        %2196 = vmatpush1.bf16.msra.mxu0 %v2041
        %2197 = vmatprep.subr.bf16.mxu0 0
        %2198 = vmatpush1.bf16.msra.mxu0 %v2042
        %2199 = vmatprep.subr.bf16.mxu0 0
        %2200 = vmatpush1.bf16.msra.mxu0 %v2043
        %2201 = vmatprep.subr.bf16.mxu0 0
        %2202 = vmatpush1.bf16.msra.mxu0 %v2044
        %2203 = vmatprep.subr.bf16.mxu0 0
        %2204 = vmatpush1.bf16.msra.mxu0 %v2045
        %2205 = vmatprep.subr.bf16.mxu0 0
        %2206 = vmatpush1.bf16.msra.mxu0 %v2046
        %2207 = vmatprep.subr.bf16.mxu0 0
        %2208 = vmatpush1.bf16.msra.mxu0 %v2047
        %2209 = vmatprep.subr.bf16.mxu0 0
        %2210 = vmatpush1.bf16.msra.mxu0 %v2048
        %2211 = vmatprep.subr.bf16.mxu0 0
        %2212 = vmatpush1.bf16.msra.mxu0 %v2049
        %2213 = vmatprep.subr.bf16.mxu0 0
        %2214 = vmatpush1.bf16.msra.mxu0 %v2050
        %2215 = vmatprep.subr.bf16.mxu0 0
        %2216 = vmatpush1.bf16.msra.mxu0 %v2051
        %2217 = vmatprep.subr.bf16.mxu0 0
        %2218 = vmatpush1.bf16.msra.mxu0 %v2052
        %2219 = vmatprep.subr.bf16.mxu0 0
        %2220 = vmatpush1.bf16.msra.mxu0 %v2053
        %2221 = vmatprep.subr.bf16.mxu0 0
        %2222 = vmatpush1.bf16.msra.mxu0 %v2054
        %2223 = vmatprep.mubr.bf16.mxu0 %v1630
        %2224 = vmatmul.mubr.bf16.gmra.mrb[0].mxu0 %v1629
        %v2225 = vpop.f32.mrb[0].mxu0
        %v2226 = vadd.f32 %v2186, %v2225
        %v2227 = vpop.f32.mrb[0].mxu0
        %v2228 = vpop.f32.mrb[0].mxu0
        %v2229 = vpop.f32.mrb[0].mxu0
        %2230 = vdwg.mxu0
        %2231 = vmatprep.subr.bf16.mxu0 0
        %2232 = vmatpush1.bf16.msra.mxu0 %v2055
        %2233 = vmatprep.subr.bf16.mxu0 0
        %2234 = vmatpush1.bf16.msra.mxu0 %v2056
        %2235 = vmatprep.subr.bf16.mxu0 0
        %2236 = vmatpush1.bf16.msra.mxu0 %v2057
        %2237 = vmatprep.subr.bf16.mxu0 0
        %2238 = vmatpush1.bf16.msra.mxu0 %v2058
        %2239 = vmatprep.subr.bf16.mxu0 0
        %2240 = vmatpush1.bf16.msra.mxu0 %v2059
        %2241 = vmatprep.subr.bf16.mxu0 0
        %2242 = vmatpush1.bf16.msra.mxu0 %v2060
        %2243 = vmatprep.subr.bf16.mxu0 0
        %2244 = vmatpush1.bf16.msra.mxu0 %v2061
        %2245 = vmatprep.subr.bf16.mxu0 0
        %2246 = vmatpush1.bf16.msra.mxu0 %v2062
        %2247 = vmatprep.subr.bf16.mxu0 0
        %2248 = vmatpush1.bf16.msra.mxu0 %v2063
        %2249 = vmatprep.subr.bf16.mxu0 0
        %2250 = vmatpush1.bf16.msra.mxu0 %v2064
        %2251 = vmatprep.subr.bf16.mxu0 0
        %2252 = vmatpush1.bf16.msra.mxu0 %v2065
        %2253 = vmatprep.subr.bf16.mxu0 0
        %2254 = vmatpush1.bf16.msra.mxu0 %v2066
        %2255 = vmatprep.subr.bf16.mxu0 0
        %2256 = vmatpush1.bf16.msra.mxu0 %v2067
        %2257 = vmatprep.subr.bf16.mxu0 0
        %2258 = vmatpush1.bf16.msra.mxu0 %v2068
        %2259 = vmatprep.subr.bf16.mxu0 0
        %2260 = vmatpush1.bf16.msra.mxu0 %v2069
        %2261 = vmatprep.subr.bf16.mxu0 0
        %2262 = vmatpush1.bf16.msra.mxu0 %v2070
        %2263 = vmatprep.mubr.bf16.mxu0 %v1632
        %2264 = vmatmul.mubr.bf16.gmra.mrb[0].mxu0 %v1631
        %v2265 = vpop.f32.mrb[0].mxu0
        %v2266 = vadd.f32 %v2226, %v2265
        %v2267 = vpop.f32.mrb[0].mxu0
        %v2268 = vpop.f32.mrb[0].mxu0
        %v2269 = vpop.f32.mrb[0].mxu0
        %2270 = vdwg.mxu0
        %2271 = vmatprep.subr.bf16.mxu0 0
        %2272 = vmatpush1.bf16.msra.mxu0 %v2071
        %2273 = vmatprep.subr.bf16.mxu0 0
        %2274 = vmatpush1.bf16.msra.mxu0 %v2072
        %2275 = vmatprep.subr.bf16.mxu0 0
        %2276 = vmatpush1.bf16.msra.mxu0 %v2073
        %2277 = vmatprep.subr.bf16.mxu0 0
        %2278 = vmatpush1.bf16.msra.mxu0 %v2074
        %2279 = vmatprep.subr.bf16.mxu0 0
        %2280 = vmatpush1.bf16.msra.mxu0 %v2075
        %2281 = vmatprep.subr.bf16.mxu0 0
        %2282 = vmatpush1.bf16.msra.mxu0 %v2076
        %2283 = vmatprep.subr.bf16.mxu0 0
        %2284 = vmatpush1.bf16.msra.mxu0 %v2077
        %2285 = vmatprep.subr.bf16.mxu0 0
        %2286 = vmatpush1.bf16.msra.mxu0 %v2078
        %2287 = vmatprep.subr.bf16.mxu0 0
        %2288 = vmatpush1.bf16.msra.mxu0 %v2079
        %2289 = vmatprep.subr.bf16.mxu0 0
        %2290 = vmatpush1.bf16.msra.mxu0 %v2080
        %2291 = vmatprep.subr.bf16.mxu0 0
        %2292 = vmatpush1.bf16.msra.mxu0 %v2081
        %2293 = vmatprep.subr.bf16.mxu0 0
        %2294 = vmatpush1.bf16.msra.mxu0 %v2082
        %2295 = vmatprep.subr.bf16.mxu0 0
        %2296 = vmatpush1.bf16.msra.mxu0 %v2083
        %2297 = vmatprep.subr.bf16.mxu0 0
        %2298 = vmatpush1.bf16.msra.mxu0 %v2084
        %2299 = vmatprep.subr.bf16.mxu0 0
        %2300 = vmatpush1.bf16.msra.mxu0 %v2085
        %2301 = vmatprep.subr.bf16.mxu0 0
        %2302 = vmatpush1.bf16.msra.mxu0 %v2086
        %2303 = vmatprep.mubr.bf16.mxu0 %v1634
        %2304 = vmatmul.mubr.bf16.gmra.mrb[0].mxu0 %v1633
        %v2305 = vpop.f32.mrb[0].mxu0
        %v2306 = vadd.f32 %v2266, %v2305
        %v2307 = vpop.f32.mrb[0].mxu0
        %v2308 = vpop.f32.mrb[0].mxu0
        %v2309 = vpop.f32.mrb[0].mxu0
        %2310 = vdwg.mxu0
        %v2311 = vadd.f32 %v1626, %v2306
        %2312 = vst [vmem:[%s320] sm:$0xff] %v2311
        // Predicated region
        $region65: #{tpu_custom_call.1} parent=43 // pred_check
          %p2313 = pneg %p322
        $region66: #{tpu_custom_call.1} parent=43 // pred_check_branch
          %2315 = sbr.rel (%p2313) target = $region68
        $region67: #{tpu_custom_call.1} parent=43 // pred_region
          %v2316 = vld [vmem:[#allocation2] sm:$0xff]
          %v2317 = vrsqrt.pop %v2316
          %v2318 = vmul.f32 %v2316, %v2317
          %vm2319 = vcmp.eq.f32.partialorder %v2316, inf
          %v2320 = vsel %vm2319, %v2316, %v2318
          %vm2321 = vcmp.eq.f32.partialorder %v2316, 0.0
          %v2322 = vand.u32 %v2316, 2147483648
          %v2323 = vsel %vm2321, %v2322, %v2320
          %v2324 = vld [vmem:[%s5] sm:$0x1]
          %2326 = vset.pattern.permute.xlu0 0
          %2327 = vperm.xlu0 %2326, %v2323
          %v2328 = vpop.permute.xlu0 %2327
          %v2331 = vlaneseq
          %v2332 = vshrl.u32 %v2331, 7
          %v2333 = vsub.s32 0, %v2332
          %v2334 = vrot.slane %v2324, %v2333
          %v2336 = vmul.f32 %v2328, %v2334
          %v2337 = vmax.f32 %v2336, 1e-08
          %v2338 = vld [vmem:[%s320] sm:$0xff]
          %v2339 = vrcp.pop %v2337
          %v2340 = vmul.f32 %v2338, %v2339
          %2341 = vst [vmem:[%s320] sm:$0xff] %v2340
        $region68: #{tpu_custom_call.1} parent=43 // pred_fallthru
          _
        %s2342 = sand.u32 %s176, 1
        %s2343 = scalar_lea.sflag [#allocation5], %s2342
        %s2344 = sand.u32 %s176, 1
        %s2345 = smul.addr %s2344, 8
        %s2346 = scalar_lea.vmem [#allocation11], %s2345
        // Predicated region
        $region69: #{tpu_custom_call.1} parent=43 // pred_check
          %p2347 = pneg %p186
        $region70: #{tpu_custom_call.1} parent=43 // pred_check_branch
          %2349 = sbr.rel (%p2347) target = $region72
        $region71: #{tpu_custom_call.1} parent=43 // pred_region
          %s2351 = ssub.s32 128, 128
          %2352 = vsyncadd %s2343, %s2351
          %s2353 = smul.addr %s29, 128
          %s2354 = scalar_lea.hbm %s6, %s2353
          %s2356 = sshll.u32 %s2346, 4
          %s2357 = int_to_ptr.vmem [resolvable:$true] %s2356
          %2359 = dma.vmem_to_hbm [thread:$0]  %s2357, 128, %s2354, %s2343
        $region72: #{tpu_custom_call.1} parent=43 // pred_fallthru
          _
      $region44: #{tpu_custom_call.1} parent=5 // pred_fallthru
        _
      %p2360 = scmp.le.s32.totalorder 2, %s20
      // Predicated region
      $region73: #{tpu_custom_call.1} parent=5 // pred_check
        %p2361 = pneg %p2360
      $region74: #{tpu_custom_call.1} parent=5 // pred_check_branch
        %2363 = sbr.rel (%p2361) target = $region76
      $region75: #{tpu_custom_call.1} parent=5 // pred_region
        %s2364 = ssub.s32 %s20, 2
        // Predicated region
        $region77: #{tpu_custom_call.1} parent=75 // pred_check
          %p2365 = pneg %p192
        $region78: #{tpu_custom_call.1} parent=75 // pred_check_branch
          %2367 = sbr.rel (%p2365) target = $region80
        $region79: #{tpu_custom_call.1} parent=75 // pred_region
          %s2368 = sand.u32 %s177, 1
          %s2369 = scalar_lea.sflag [#allocation5], %s2368
          %s2370 = sand.u32 %s177, 1
          %s2371 = smul.addr %s2370, 8
          %s2372 = scalar_lea.vmem [#allocation11], %s2371
          %2373 = dma.done %s2369, 128
        $region80: #{tpu_custom_call.1} parent=75 // pred_fallthru
          _
      $region76: #{tpu_custom_call.1} parent=5 // pred_fallthru
        _
    $region6: #{tpu_custom_call.1} parent=1 // loop_footer
      %s24 = sadd.s32 1, %s20
    $region7: #{tpu_custom_call.1} parent=1 // loop_footer_branch
      %19 = sbr.rel target = $region3
    $region8: #{tpu_custom_call.1} parent=1 // loop_exit
      _
    %2374 = vsyncpa [#allocation4], 1
    %s2375 = scalar_lea.sflag [#allocation4], 1
    %2376 = vsyncpa %s2375, 1
    %2377 = vsyncpa [#allocation7], 1
    %2378 = vsyncpa [#allocation10], 1
    %2379 = vsyncpa [#allocation5], 1
    %s2380 = scalar_lea.sflag [#allocation5], 1
    %2381 = vsyncpa %s2380, 1

</llo_original>
